<compile_context>
chip_gen: v7x
topology: tpu7x:2x2x1
jax: 0.10.0
libtpu: 0.0.40
codegen_flags: <defaults>
</compile_context>

<pallas_src>
import functools

import jax
import jax.numpy as jnp
from jax.experimental import pallas as pl
from jax.experimental.pallas import tpu as pltpu

BN_EPS = 1e-5  # torch nn.BatchNorm1d default eps
LANE = 128


# ----------------------------------------------------------------------------
# Fused kernel.  Grid = (T // Tb  [parallel],  HW // HWc  [arbitrary / reduction]).
#   per chunk : im2col-conv (one MXU matmul) -> bias -> ReLU -> pooled SUM into scratch
#   last chunk: fc1(+bn1, /HW folded) -> relu -> fc2(+bn2) -> relu -> (dropout=id) -> fc3
# ----------------------------------------------------------------------------
def _fused_kernel(patch_ref, cw_ref, cb_ref,
                  w1_ref, b1_ref, w2_ref, b2_ref, w3_ref, b3_ref,
                  o_ref, feat_acc, *, Tb, B, HWc):
    # TODO(synk): the pretrained ResNet-152 backbone is replaced by this surrogate
    #             conv+GAP feature extractor (no checkpoint available in-script).
    c = pl.program_id(1)

    @pl.when(c == 0)
    def _():
        feat_acc[...] = jnp.zeros_like(feat_acc)

    # conv over this spatial chunk as a single im2col matmul (bf16 in, f32 acc)
    kcp = patch_ref.shape[-1]
    patches = patch_ref[...].reshape(Tb * B * HWc, kcp)            # (Tb*B*HWc, Kcp) bf16
    act = jnp.dot(patches, cw_ref[...],
                  preferred_element_type=jnp.float32)              # (Tb*B*HWc, Cf) f32
    act = jnp.maximum(act + cb_ref[...], 0.0)                      # bias + ReLU (f32)

    # pooled SUM per (t, b); the 1/(H*W) mean scale is folded into w1 in the wrapper.
    cf = act.shape[-1]
    feat_acc[...] += jnp.sum(act.reshape(Tb * B, HWc, cf), axis=1)

    @pl.when(c == pl.num_programs(1) - 1)
    def _():
        feats = feat_acc[...]                                      # (Tb*B, Cf) f32

        # fc1 (BN1 and 1/HW folded into w1/b1) + ReLU
        h = jnp.dot(feats.astype(jnp.bfloat16), w1_ref[...],
                    preferred_element_type=jnp.float32) + b1_ref[...]
        h = jnp.maximum(h, 0.0)

        # fc2 (BN2 folded) + ReLU
        h = jnp.dot(h.astype(jnp.bfloat16), w2_ref[...],
                    preferred_element_type=jnp.float32) + b2_ref[...]
        h = jnp.maximum(h, 0.0)

        # TODO(synk): training-mode dropout (p=0.3) not implemented; eval mode is identity.
        out = jnp.dot(h.astype(jnp.bfloat16), w3_ref[...],
                      preferred_element_type=jnp.float32) + b3_ref[...]

        o_ref[...] = out                                           # (Tb*B, Ep) lane-dense


# ----------------------------------------------------------------------------
# Wrapper: layout plumbing (im2col, light padding, BN/mean fold, bf16 casts) in JAX.
# ----------------------------------------------------------------------------
def res_cnn_encoder_forward(x_3d, params, *, Tb=4, HWc=128):
    """x_3d: (B, T, C, H, W) float32 -> (B, T, CNN_embed_dim)."""
    B, T, C, H, W = x_3d.shape
    Cf = params["conv_w"].shape[-1]
    E = params["w3"].shape[-1]
    HW = H * W

    if T % Tb != 0:
        Tb = 1
    if HW % HWc != 0 or HWc % 8 != 0:
        HWc = HW                               # fall back to a single spatial chunk
    n_hw = HW // HWc

    Kc = 9 * C
    Kcp = -(-Kc // 32) * 32                    # pad contraction dim only to 32 (not 128)
    Ep = -(-E // LANE) * LANE                  # pad embedding dim to a 128 multiple

    # ---- im2col in the wrapper -> (T, B, HW, Kcp) bf16 patch tensor ----
    # TODO(synk): for realistic resolutions, form patches in-kernel from the raw padded
    #             frames to avoid the ~10x im2col HBM round-trip.
    x = jnp.transpose(x_3d, (1, 0, 3, 4, 2)).astype(jnp.float32)         # (T,B,H,W,C)
    xp = jnp.pad(x, ((0, 0), (0, 0), (1, 1), (1, 1), (0, 0)))
    cols = [xp[:, :, dy:dy + H, dx:dx + W, :]
            for dy in range(3) for dx in range(3)]                       # (dy,dx,c) order
    patch = jnp.concatenate(cols, axis=-1).reshape(T, B, HW, Kc)
    patch = jnp.pad(patch, ((0, 0), (0, 0), (0, 0), (0, Kcp - Kc))).astype(jnp.bfloat16)

    # ---- conv weights: (3,3,C,Cf) -> (Kcp, Cf) bf16 ----
    cw = params["conv_w"].reshape(Kc, Cf)
    cw = jnp.pad(cw, ((0, Kcp - Kc), (0, 0))).astype(jnp.bfloat16)
    cb = params["conv_b"].astype(jnp.float32)                            # (1, Cf)

    # ---- fold eval-mode BatchNorm (and the 1/HW GAP scale) into fc1 / fc2 ----
    s1 = params["g1"] * jax.lax.rsqrt(params["v1"] + BN_EPS)             # (1, H1)
    w1 = (params["w1"] * s1 / HW).astype(jnp.bfloat16)                   # /HW: pooled SUM in kernel
    b1 = ((params["b1"] - params["m1"]) * s1 + params["be1"]).astype(jnp.float32)
    s2 = params["g2"] * jax.lax.rsqrt(params["v2"] + BN_EPS)
    w2 = (params["w2"] * s2).astype(jnp.bfloat16)
    b2 = ((params["b2"] - params["m2"]) * s2 + params["be2"]).astype(jnp.float32)

    # ---- fc3, embedding dim zero-padded to lane width ----
    w3 = jnp.pad(params["w3"], ((0, 0), (0, Ep - E))).astype(jnp.bfloat16)
    b3 = jnp.pad(params["b3"], ((0, 0), (0, Ep - E))).astype(jnp.float32)

    weights = [cw, cb, w1, b1, w2, b2, w3, b3]

    # TODO(synk): weight BlockSpecs could be single-buffered (pipeline_mode=pl.Buffered(1))
    #             to reclaim ~100-200 KiB of VMEM at larger block sizes.
    def full(a):  # whole-array BlockSpec (block == array shape, constant across grid)
        return pl.BlockSpec(a.shape, lambda t, c, _nd=a.ndim: (0,) * _nd)

    fused = pl.pallas_call(
        functools.partial(_fused_kernel, Tb=Tb, B=B, HWc=HWc),
        grid=(T // Tb, n_hw),
        in_specs=[pl.BlockSpec((Tb, B, HWc, Kcp), lambda t, c: (t, 0, c, 0))]
                 + [full(a) for a in weights],
        out_specs=pl.BlockSpec((Tb * B, Ep), lambda t, c: (t, 0)),
        out_shape=jax.ShapeDtypeStruct((T * B, Ep), jnp.float32),
        scratch_shapes=[pltpu.VMEM((Tb * B, Cf), jnp.float32)],
        compiler_params=pltpu.CompilerParams(
            dimension_semantics=("parallel", "arbitrary"),
            vmem_limit_bytes=32 * 1024 * 1024),
    )
    out_flat = fused(patch, *weights)                         # (T*B, Ep), row = t*B + b
    out = out_flat.reshape(T, B, Ep)[:, :, :E]                # == torch.stack(dim=0)
    return jnp.transpose(out, (1, 0, 2))                      # (B, T, E) == .transpose_(0, 1)


# ----------------------------------------------------------------------------
# Deterministic parameter initialization (shapes mirror the module, scaled down)
# ----------------------------------------------------------------------------
def init_params(key, Cin=3, Cf=128, H1=128, H2=128, E=32):
    ks = jax.random.split(key, 20)
    p = {}
    p["conv_w"] = 0.1 * jax.random.normal(ks[0], (3, 3, Cin, Cf), jnp.float32)
    p["conv_b"] = 0.1 * jax.random.normal(ks[1], (1, Cf), jnp.float32)

    # fc1 / bn1
    p["w1"] = 0.05 * jax.random.normal(ks[2], (Cf, H1), jnp.float32)
    p["b1"] = 0.05 * jax.random.normal(ks[3], (1, H1), jnp.float32)
    p["g1"] = 1.0 + 0.1 * jax.random.normal(ks[4], (1, H1), jnp.float32)
    p["be1"] = 0.1 * jax.random.normal(ks[5], (1, H1), jnp.float32)
    p["m1"] = 0.1 * jax.random.normal(ks[6], (1, H1), jnp.float32)
    p["v1"] = 1.0 + 0.1 * jnp.abs(jax.random.normal(ks[7], (1, H1), jnp.float32))

    # fc2 / bn2
    p["w2"] = 0.05 * jax.random.normal(ks[8], (H1, H2), jnp.float32)
    p["b2"] = 0.05 * jax.random.normal(ks[9], (1, H2), jnp.float32)
    p["g2"] = 1.0 + 0.1 * jax.random.normal(ks[10], (1, H2), jnp.float32)
    p["be2"] = 0.1 * jax.random.normal(ks[11], (1, H2), jnp.float32)
    p["m2"] = 0.1 * jax.random.normal(ks[12], (1, H2), jnp.float32)
    p["v2"] = 1.0 + 0.1 * jnp.abs(jax.random.normal(ks[13], (1, H2), jnp.float32))

    # fc3
    p["w3"] = 0.05 * jax.random.normal(ks[14], (H2, E), jnp.float32)
    p["b3"] = 0.05 * jax.random.normal(ks[15], (1, E), jnp.float32)
    return p


# ----------------------------------------------------------------------------
# Pure-JAX f32 reference (module semantics: conv+GAP surrogate, explicit BN)
# ----------------------------------------------------------------------------
def reference_forward(x_3d, p):
    B, T, C, H, W = x_3d.shape
    Cf = p["conv_w"].shape[-1]
    x = jnp.transpose(x_3d, (1, 0, 3, 4, 2)).astype(jnp.float32)
    xp = jnp.pad(x, ((0, 0), (0, 0), (1, 1), (1, 1), (0, 0)))
    acc = jnp.zeros((T, B, H, W, Cf), jnp.float32)
    for dy in range(3):
        for dx in range(3):
            acc = acc + jnp.einsum("tbhwc,cf->tbhwf",
                                   xp[:, :, dy:dy + H, dx:dx + W, :],
                                   p["conv_w"][dy, dx])
    acc = jnp.maximum(acc + p["conv_b"][0], 0.0)
    f = jnp.mean(acc, axis=(2, 3))  # (T, B, Cf)

    def bn(h, g, be, m, v):
        return (h - m) * jax.lax.rsqrt(v + BN_EPS) * g + be

    h = f @ p["w1"] + p["b1"]
    h = jnp.maximum(bn(h, p["g1"], p["be1"], p["m1"], p["v1"]), 0.0)
    h = h @ p["w2"] + p["b2"]
    h = jnp.maximum(bn(h, p["g2"], p["be2"], p["m2"], p["v2"]), 0.0)
    out = h @ p["w3"] + p["b3"]
    return jnp.transpose(out, (1, 0, 2))


if __name__ == "__main__":
    B, T, C, H, W = 2, 8, 3, 16, 16
    E = 32
    x_3d = jax.random.normal(jax.random.PRNGKey(0), (B, T, C, H, W), jnp.float32)
    params = init_params(jax.random.PRNGKey(42), Cin=C, Cf=128, H1=128, H2=128, E=E)

    out = jax.block_until_ready(res_cnn_encoder_forward(x_3d, params))
    ref = jax.block_until_ready(reference_forward(x_3d, params))

    assert out.shape == (B, T, E), out.shape
    max_err = float(jnp.max(jnp.abs(out - ref)))
    # bf16 matmul operands vs. pure-f32 reference -> loosened tolerance.
    assert jnp.allclose(out, ref, atol=2e-2, rtol=2e-2), max_err

    print("KERNEL_OK")
</pallas_src>

<mosaic_0001>
module attributes {stable_mosaic.version = 11 : i64} {
  func.func @_fused_kernel(%arg0: i32, %arg1: i32, %arg2: memref<4x2x128x32xbf16, #tpu.memory_space<vmem>>, %arg3: memref<32x128xbf16, #tpu.memory_space<vmem>>, %arg4: memref<1x128xf32, #tpu.memory_space<vmem>>, %arg5: memref<128x128xbf16, #tpu.memory_space<vmem>>, %arg6: memref<1x128xf32, #tpu.memory_space<vmem>>, %arg7: memref<128x128xbf16, #tpu.memory_space<vmem>>, %arg8: memref<1x128xf32, #tpu.memory_space<vmem>>, %arg9: memref<128x128xbf16, #tpu.memory_space<vmem>>, %arg10: memref<1x128xf32, #tpu.memory_space<vmem>>, %arg11: memref<8x128xf32, #tpu.memory_space<vmem>>, %arg12: memref<8x128xf32, #tpu.memory_space<vmem>>) attributes {dimension_semantics = [#tpu.dimension_semantics<parallel>, #tpu.dimension_semantics<arbitrary>], iteration_bounds = array<i64: 2, 2>, scalar_prefetch = 0 : i64, scratch_operands = 1 : i64, tpu.core_type = #tpu.core_type<tc>, window_params = [{transform_indices = @transform_0, window_bounds = array<i64: 4, 2, 128, 32>}, {pipeline_mode = #tpu.pipeline_mode<synchronous>, transform_indices = @transform_1, window_bounds = array<i64: 32, 128>}, {pipeline_mode = #tpu.pipeline_mode<synchronous>, transform_indices = @transform_2, window_bounds = array<i64: 1, 128>}, {pipeline_mode = #tpu.pipeline_mode<synchronous>, transform_indices = @transform_3, window_bounds = array<i64: 128, 128>}, {pipeline_mode = #tpu.pipeline_mode<synchronous>, transform_indices = @transform_4, window_bounds = array<i64: 1, 128>}, {pipeline_mode = #tpu.pipeline_mode<synchronous>, transform_indices = @transform_5, window_bounds = array<i64: 128, 128>}, {pipeline_mode = #tpu.pipeline_mode<synchronous>, transform_indices = @transform_6, window_bounds = array<i64: 1, 128>}, {pipeline_mode = #tpu.pipeline_mode<synchronous>, transform_indices = @transform_7, window_bounds = array<i64: 128, 128>}, {pipeline_mode = #tpu.pipeline_mode<synchronous>, transform_indices = @transform_8, window_bounds = array<i64: 1, 128>}, {transform_indices = @transform_9, window_bounds = array<i64: 8, 128>}]} {
    %c0_i32 = arith.constant 0 : i32
    %0 = arith.cmpi eq, %arg1, %c0_i32 : i32
    %1 = arith.extui %0 : i1 to i32
    %c0_i32_0 = arith.constant 0 : i32
    %2 = arith.cmpi ne, %1, %c0_i32_0 : i32
    scf.if %2 {
      %cst_15 = arith.constant 0.000000e+00 : f32
      %20 = vector.broadcast %cst_15 : f32 to vector<8x128xf32>
      %c0_16 = arith.constant 0 : index
      %c0_17 = arith.constant 0 : index
      %21 = vector.load %arg12[%c0_16, %c0_17] : memref<8x128xf32, #tpu.memory_space<vmem>>, vector<8x128xf32>
      tpu.vector_store %arg12[%c0_16, %c0_17], %20 {strides = array<i32>} : memref<8x128xf32, #tpu.memory_space<vmem>>, vector<8x128xf32>,
    } else {
    }
    %c0 = arith.constant 0 : index
    %c0_1 = arith.constant 0 : index
    %c0_2 = arith.constant 0 : index
    %c0_3 = arith.constant 0 : index
    %3 = vector.load %arg2[%c0, %c0_1, %c0_2, %c0_3] : memref<4x2x128x32xbf16, #tpu.memory_space<vmem>>, vector<4x2x128x32xbf16>
    %4 = vector.shape_cast %3 : vector<4x2x128x32xbf16> to vector<1024x32xbf16>
    %c0_4 = arith.constant 0 : index
    %c0_5 = arith.constant 0 : index
    %5 = vector.load %arg3[%c0_4, %c0_5] : memref<32x128xbf16, #tpu.memory_space<vmem>>, vector<32x128xbf16>
    %cst = arith.constant dense<0.000000e+00> : vector<1024x128xf32>
    %6 = tpu.matmul %4, %5, %cst {dimension_numbers = #tpu.dot_dimension_numbers<[1], [0], [0], [1], [0, 0, 1, 1], [], []>} : vector<1024x32xbf16>, vector<32x128xbf16>, vector<1024x128xf32> -> vector<1024x128xf32>
    %c0_6 = arith.constant 0 : index
    %c0_7 = arith.constant 0 : index
    %7 = vector.load %arg4[%c0_6, %c0_7] : memref<1x128xf32, #tpu.memory_space<vmem>>, vector<1x128xf32>
    %8 = vector.broadcast %7 : vector<1x128xf32> to vector<1024x128xf32>
    %9 = arith.addf %6, %8 : vector<1024x128xf32>
    %cst_8 = arith.constant 0.000000e+00 : f32
    %10 = vector.broadcast %cst_8 : f32 to vector<1024x128xf32>
    %11 = arith.maximumf %9, %10 : vector<1024x128xf32>
    %c0_9 = arith.constant 0 : index
    %c0_10 = arith.constant 0 : index
    %12 = vector.load %arg12[%c0_9, %c0_10] : memref<8x128xf32, #tpu.memory_space<vmem>>, vector<8x128xf32>
    %13 = vector.shape_cast %11 : vector<1024x128xf32> to vector<8x128x128xf32>
    %cst_11 = arith.constant dense<0.000000e+00> : vector<8x128xf32>
    %14 = vector.multi_reduction <add>, %13, %cst_11 [1] : vector<8x128x128xf32> to vector<8x128xf32>
    %15 = arith.addf %12, %14 : vector<8x128xf32>
    %c0_12 = arith.constant 0 : index
    %c0_13 = arith.constant 0 : index
    %16 = vector.load %arg12[%c0_12, %c0_13] : memref<8x128xf32, #tpu.memory_space<vmem>>, vector<8x128xf32>
    tpu.vector_store %arg12[%c0_12, %c0_13], %15 {strides = array<i32>} : memref<8x128xf32, #tpu.memory_space<vmem>>, vector<8x128xf32>,
    %c1_i32 = arith.constant 1 : i32
    %17 = arith.cmpi eq, %arg1, %c1_i32 : i32
    %18 = arith.extui %17 : i1 to i32
    %c0_i32_14 = arith.constant 0 : i32
    %19 = arith.cmpi ne, %18, %c0_i32_14 : i32
    scf.if %19 {
      %c0_15 = arith.constant 0 : index
      %c0_16 = arith.constant 0 : index
      %20 = vector.load %arg12[%c0_15, %c0_16] : memref<8x128xf32, #tpu.memory_space<vmem>>, vector<8x128xf32>
      %21 = arith.truncf %20 : vector<8x128xf32> to vector<8x128xbf16>
      %c0_17 = arith.constant 0 : index
      %c0_18 = arith.constant 0 : index
      %22 = vector.load %arg5[%c0_17, %c0_18] : memref<128x128xbf16, #tpu.memory_space<vmem>>, vector<128x128xbf16>
      %cst_19 = arith.constant dense<0.000000e+00> : vector<8x128xf32>
      %23 = tpu.matmul %21, %22, %cst_19 {dimension_numbers = #tpu.dot_dimension_numbers<[1], [0], [0], [1], [0, 0, 1, 1], [], []>} : vector<8x128xbf16>, vector<128x128xbf16>, vector<8x128xf32> -> vector<8x128xf32>
      %c0_20 = arith.constant 0 : index
      %c0_21 = arith.constant 0 : index
      %24 = vector.load %arg6[%c0_20, %c0_21] : memref<1x128xf32, #tpu.memory_space<vmem>>, vector<1x128xf32>
      %25 = vector.broadcast %24 : vector<1x128xf32> to vector<8x128xf32>
      %26 = arith.addf %23, %25 : vector<8x128xf32>
      %cst_22 = arith.constant 0.000000e+00 : f32
      %27 = vector.broadcast %cst_22 : f32 to vector<8x128xf32>
      %28 = arith.maximumf %26, %27 : vector<8x128xf32>
      %29 = arith.truncf %28 : vector<8x128xf32> to vector<8x128xbf16>
      %c0_23 = arith.constant 0 : index
      %c0_24 = arith.constant 0 : index
      %30 = vector.load %arg7[%c0_23, %c0_24] : memref<128x128xbf16, #tpu.memory_space<vmem>>, vector<128x128xbf16>
      %cst_25 = arith.constant dense<0.000000e+00> : vector<8x128xf32>
      %31 = tpu.matmul %29, %30, %cst_25 {dimension_numbers = #tpu.dot_dimension_numbers<[1], [0], [0], [1], [0, 0, 1, 1], [], []>} : vector<8x128xbf16>, vector<128x128xbf16>, vector<8x128xf32> -> vector<8x128xf32>
      %c0_26 = arith.constant 0 : index
      %c0_27 = arith.constant 0 : index
      %32 = vector.load %arg8[%c0_26, %c0_27] : memref<1x128xf32, #tpu.memory_space<vmem>>, vector<1x128xf32>
      %33 = vector.broadcast %32 : vector<1x128xf32> to vector<8x128xf32>
      %34 = arith.addf %31, %33 : vector<8x128xf32>
      %cst_28 = arith.constant 0.000000e+00 : f32
      %35 = vector.broadcast %cst_28 : f32 to vector<8x128xf32>
      %36 = arith.maximumf %34, %35 : vector<8x128xf32>
      %37 = arith.truncf %36 : vector<8x128xf32> to vector<8x128xbf16>
      %c0_29 = arith.constant 0 : index
      %c0_30 = arith.constant 0 : index
      %38 = vector.load %arg9[%c0_29, %c0_30] : memref<128x128xbf16, #tpu.memory_space<vmem>>, vector<128x128xbf16>
      %cst_31 = arith.constant dense<0.000000e+00> : vector<8x128xf32>
      %39 = tpu.matmul %37, %38, %cst_31 {dimension_numbers = #tpu.dot_dimension_numbers<[1], [0], [0], [1], [0, 0, 1, 1], [], []>} : vector<8x128xbf16>, vector<128x128xbf16>, vector<8x128xf32> -> vector<8x128xf32>
      %c0_32 = arith.constant 0 : index
      %c0_33 = arith.constant 0 : index
      %40 = vector.load %arg10[%c0_32, %c0_33] : memref<1x128xf32, #tpu.memory_space<vmem>>, vector<1x128xf32>
      %41 = vector.broadcast %40 : vector<1x128xf32> to vector<8x128xf32>
      %42 = arith.addf %39, %41 : vector<8x128xf32>
      %c0_34 = arith.constant 0 : index
      %c0_35 = arith.constant 0 : index
      %43 = vector.load %arg11[%c0_34, %c0_35] : memref<8x128xf32, #tpu.memory_space<vmem>>, vector<8x128xf32>
      tpu.vector_store %arg11[%c0_34, %c0_35], %42 {strides = array<i32>} : memref<8x128xf32, #tpu.memory_space<vmem>>, vector<8x128xf32>,
    } else {
    }
    return
  }
  func.func @transform_0(%arg0: i32, %arg1: i32) -> (i32, i32, i32, i32) {
    %c0_i32 = arith.constant 0 : i32
    %c0_i32_0 = arith.constant 0 : i32
    %c0_i32_1 = arith.constant 0 : i32
    return %arg0, %c0_i32, %arg1, %c0_i32_0 : i32, i32, i32, i32
  }
  func.func @transform_1(%arg0: i32, %arg1: i32) -> (i32, i32) {
    %c0_i32 = arith.constant 0 : i32
    %c0_i32_0 = arith.constant 0 : i32
    %c0_i32_1 = arith.constant 0 : i32
    return %c0_i32, %c0_i32_0 : i32, i32
  }
  func.func @transform_2(%arg0: i32, %arg1: i32) -> (i32, i32) {
    %c0_i32 = arith.constant 0 : i32
    %c0_i32_0 = arith.constant 0 : i32
    %c0_i32_1 = arith.constant 0 : i32
    return %c0_i32, %c0_i32_0 : i32, i32
  }
  func.func @transform_3(%arg0: i32, %arg1: i32) -> (i32, i32) {
    %c0_i32 = arith.constant 0 : i32
    %c0_i32_0 = arith.constant 0 : i32
    %c0_i32_1 = arith.constant 0 : i32
    return %c0_i32, %c0_i32_0 : i32, i32
  }
  func.func @transform_4(%arg0: i32, %arg1: i32) -> (i32, i32) {
    %c0_i32 = arith.constant 0 : i32
    %c0_i32_0 = arith.constant 0 : i32
    %c0_i32_1 = arith.constant 0 : i32
    return %c0_i32, %c0_i32_0 : i32, i32
  }
  func.func @transform_5(%arg0: i32, %arg1: i32) -> (i32, i32) {
    %c0_i32 = arith.constant 0 : i32
    %c0_i32_0 = arith.constant 0 : i32
    %c0_i32_1 = arith.constant 0 : i32
    return %c0_i32, %c0_i32_0 : i32, i32
  }
  func.func @transform_6(%arg0: i32, %arg1: i32) -> (i32, i32) {
    %c0_i32 = arith.constant 0 : i32
    %c0_i32_0 = arith.constant 0 : i32
    %c0_i32_1 = arith.constant 0 : i32
    return %c0_i32, %c0_i32_0 : i32, i32
  }
  func.func @transform_7(%arg0: i32, %arg1: i32) -> (i32, i32) {
    %c0_i32 = arith.constant 0 : i32
    %c0_i32_0 = arith.constant 0 : i32
    %c0_i32_1 = arith.constant 0 : i32
    return %c0_i32, %c0_i32_0 : i32, i32
  }
  func.func @transform_8(%arg0: i32, %arg1: i32) -> (i32, i32) {
    %c0_i32 = arith.constant 0 : i32
    %c0_i32_0 = arith.constant 0 : i32
    %c0_i32_1 = arith.constant 0 : i32
    return %c0_i32, %c0_i32_0 : i32, i32
  }
  func.func @transform_9(%arg0: i32, %arg1: i32) -> (i32, i32) {
    %c0_i32 = arith.constant 0 : i32
    %c0_i32_0 = arith.constant 0 : i32
    return %arg0, %c0_i32 : i32, i32
  }
}

</mosaic_0001>

<llo_original>
// kernel: tpu_custom_call.1
$region0: #{tpu_custom_call.1}
  #allocation0 [shape = 'u32[]', space=smem, size = 0x4, offset = 0x4, fixed_abs, tag = 'smem constant byte address 0x4 - core index']
  #allocation1 [shape = 'u32[144,128]{1,0:T(1,128)}', space=vmem, size = 0x12000, scoped, tag = 'internal scratch']
  #allocation2 [shape = 'f32[8,128]{1,0:T(8,128)}', space=vmem, size = 0x1000, scoped, tag = 'scratch operand']
  %s0 = inlined_call_operand.vmem [shape: bf16[8,2,256,32], index: 0, kind: input, shape index: {}]
  %s1 = inlined_call_operand.vmem [shape: bf16[32,128], index: 1, kind: input, shape index: {}]
  %s2 = inlined_call_operand.vmem [shape: f32[1,128], index: 2, kind: input, shape index: {}]
  %s3 = inlined_call_operand.vmem [shape: bf16[128,128], index: 3, kind: input, shape index: {}]
  %s4 = inlined_call_operand.vmem [shape: f32[1,128], index: 4, kind: input, shape index: {}]
  %s5 = inlined_call_operand.vmem [shape: bf16[128,128], index: 5, kind: input, shape index: {}]
  %s6 = inlined_call_operand.vmem [shape: f32[1,128], index: 6, kind: input, shape index: {}]
  %s7 = inlined_call_operand.vmem [shape: bf16[128,128], index: 7, kind: input, shape index: {}]
  %s8 = inlined_call_operand.vmem [shape: f32[1,128], index: 8, kind: input, shape index: {}]
  %s9 = inlined_call_operand.hbm [shape: f32[16,128], index: 9, kind: output, shape index: {}]
  %s10 = sld [smem:[#allocation0]]
  $region118: #{tpu_custom_call.1} parent=0
    _
  %s12 = ssub.s32 1, %s10
  %s13 = scalar_select 0, %s12, %s10
  $region1: #{tpu_custom_call.1} parent=0
    #allocation3 [shape = 'u8[524288]{0}', space=vmem, size = 0x80000, scoped, tag = 'input window, operand 0']
    #allocation4 [shape = 'u8[8192]{0}', space=vmem, size = 0x2000, scoped, tag = 'output window, operand 0']
    #allocation5 [shape = 's32[2]{0}', space=sflag, size = 0x8, scoped, tag = 'scoped memory for tpu_custom_call.1']
    %14 = vsyncpa [#allocation5], 0
    %s15 = scalar_lea.sflag [#allocation5], 1
    %16 = vsyncpa %s15, 0
    loop: start=0, step=1, limit=6
    $region2: #{tpu_custom_call.1} parent=1 // loop_pre_header
      _
    $region3: #{tpu_custom_call.1} parent=1 // loop_header
      %s18 = sphi 0, %s22
      %p19 = scmp.ge.s32.totalorder %s18, 6
      %s25 = sphi 0, %s37
      %s26 = sphi 0, %s33
      %s27 = sphi 0, %s25
      %s28 = sphi 0, %s26
      %s29 = sphi 0, %s27
      %s30 = sphi 0, %s28
      %s42 = sphi 0, %s44
      %s45 = sphi 0, %s42
      %s46 = sphi 0, %s45
      %s62 = sphi 0, %s46
      %s66 = sphi 0, %s66
      %s68 = sphi 0, %s66
      %s69 = sphi 0, %s68
      %s83 = sphi 0, %s69
      %s87 = sphi 0, %s87
      %s89 = sphi 0, %s87
      %s90 = sphi 0, %s89
      %s104 = sphi 0, %s90
      %s108 = sphi 0, %s108
      %s110 = sphi 0, %s108
      %s111 = sphi 0, %s110
      %s125 = sphi 0, %s111
      %s129 = sphi 0, %s129
      %s131 = sphi 0, %s129
      %s132 = sphi 0, %s131
      %s146 = sphi 0, %s132
      %s150 = sphi 0, %s150
      %s152 = sphi 0, %s150
      %s153 = sphi 0, %s152
      %s167 = sphi 0, %s153
      %s171 = sphi 0, %s171
      %s173 = sphi 0, %s171
      %s174 = sphi 0, %s173
      %s188 = sphi 0, %s174
      %s192 = sphi 0, %s192
      %s194 = sphi 0, %s192
      %s195 = sphi 0, %s194
      %s209 = sphi 0, %s195
      %s213 = sphi 0, %s213
      %s215 = sphi 0, %s213
      %s216 = sphi 0, %s215
      %s230 = sphi 0, %s216
      %s236 = sphi 0, %s238
      %s239 = sphi 0, %s236
      %s240 = sphi 0, %s239
      %s256 = sphi 0, %s240
    $region4: #{tpu_custom_call.1} parent=1 // loop_header_branch
      %21 = sbr.rel (%p19) target = $region8
    $region5: #{tpu_custom_call.1} parent=1 // loop_body
      %s23 = ssub.s32 %s18, 1
      %s24 = ssub.s32 %s18, 2
      %s31 = sadd.s32 1, %s26
      %p32 = scmp.ge.s32.totalorder %s31, 2
      %s33 = scalar_select %p32, 0, %s31
      %s34 = sadd.s32 1, %s25
      %s35 = scalar_select %p32, %s34, %s25
      %p36 = scmp.ge.s32.totalorder %s35, 2
      %s37 = scalar_select %p36, 0, %s35
      %s38 = ssub.s32 %s25, %s37
      %s39 = ssub.s32 %s26, %s33
      %s40 = sor.u32 %s38, %s39
      %p41 = scmp.eq.s32.totalorder %s40, 0
      %s43 = sadd.s32 %s42, 1
      %s44 = scalar_select %p41, %s42, %s43
      %p47 = pneg %p41
      %p48 = scmp.eq.s32.totalorder %s18, 3
      %p49 = por %p47, %p48
      %p50 = scmp.ne.s32.totalorder %s42, %s45
      %p51 = scmp.eq.s32.totalorder %s18, 0
      %p52 = por %p50, %p51
      %p53 = scmp.ne.s32.totalorder %s42, %s45
      %p54 = scmp.eq.s32.totalorder %s23, 3
      %p55 = por %p53, %p54
      %p56 = scmp.ne.s32.totalorder %s45, %s46
      %p57 = scmp.eq.s32.totalorder %s23, 0
      %p58 = por %p56, %p57
      %p59 = scmp.ne.s32.totalorder %s45, %s46
      %p60 = scmp.eq.s32.totalorder %s24, 3
      %p61 = por %p59, %p60
      %p63 = scmp.ne.s32.totalorder %s46, %s62
      %p64 = scmp.eq.s32.totalorder %s24, 0
      %p65 = por %p63, %p64
      %s67 = sadd.s32 %s66, 1
      %p70 = scmp.eq.s32.totalorder %s18, 3
      %p71 = scmp.ne.s32.totalorder %s66, %s68
      %p72 = scmp.eq.s32.totalorder %s18, 0
      %p73 = por %p71, %p72
      %p74 = scmp.ne.s32.totalorder %s66, %s68
      %p75 = scmp.eq.s32.totalorder %s23, 3
      %p76 = por %p74, %p75
      %p77 = scmp.ne.s32.totalorder %s68, %s69
      %p78 = scmp.eq.s32.totalorder %s23, 0
      %p79 = por %p77, %p78
      %p80 = scmp.ne.s32.totalorder %s68, %s69
      %p81 = scmp.eq.s32.totalorder %s24, 3
      %p82 = por %p80, %p81
      %p84 = scmp.ne.s32.totalorder %s69, %s83
      %p85 = scmp.eq.s32.totalorder %s24, 0
      %p86 = por %p84, %p85
      %s88 = sadd.s32 %s87, 1
      %p91 = scmp.eq.s32.totalorder %s18, 3
      %p92 = scmp.ne.s32.totalorder %s87, %s89
      %p93 = scmp.eq.s32.totalorder %s18, 0
      %p94 = por %p92, %p93
      %p95 = scmp.ne.s32.totalorder %s87, %s89
      %p96 = scmp.eq.s32.totalorder %s23, 3
      %p97 = por %p95, %p96
      %p98 = scmp.ne.s32.totalorder %s89, %s90
      %p99 = scmp.eq.s32.totalorder %s23, 0
      %p100 = por %p98, %p99
      %p101 = scmp.ne.s32.totalorder %s89, %s90
      %p102 = scmp.eq.s32.totalorder %s24, 3
      %p103 = por %p101, %p102
      %p105 = scmp.ne.s32.totalorder %s90, %s104
      %p106 = scmp.eq.s32.totalorder %s24, 0
      %p107 = por %p105, %p106
      %s109 = sadd.s32 %s108, 1
      %p112 = scmp.eq.s32.totalorder %s18, 3
      %p113 = scmp.ne.s32.totalorder %s108, %s110
      %p114 = scmp.eq.s32.totalorder %s18, 0
      %p115 = por %p113, %p114
      %p116 = scmp.ne.s32.totalorder %s108, %s110
      %p117 = scmp.eq.s32.totalorder %s23, 3
      %p118 = por %p116, %p117
      %p119 = scmp.ne.s32.totalorder %s110, %s111
      %p120 = scmp.eq.s32.totalorder %s23, 0
      %p121 = por %p119, %p120
      %p122 = scmp.ne.s32.totalorder %s110, %s111
      %p123 = scmp.eq.s32.totalorder %s24, 3
      %p124 = por %p122, %p123
      %p126 = scmp.ne.s32.totalorder %s111, %s125
      %p127 = scmp.eq.s32.totalorder %s24, 0
      %p128 = por %p126, %p127
      %s130 = sadd.s32 %s129, 1
      %p133 = scmp.eq.s32.totalorder %s18, 3
      %p134 = scmp.ne.s32.totalorder %s129, %s131
      %p135 = scmp.eq.s32.totalorder %s18, 0
      %p136 = por %p134, %p135
      %p137 = scmp.ne.s32.totalorder %s129, %s131
      %p138 = scmp.eq.s32.totalorder %s23, 3
      %p139 = por %p137, %p138
      %p140 = scmp.ne.s32.totalorder %s131, %s132
      %p141 = scmp.eq.s32.totalorder %s23, 0
      %p142 = por %p140, %p141
      %p143 = scmp.ne.s32.totalorder %s131, %s132
      %p144 = scmp.eq.s32.totalorder %s24, 3
      %p145 = por %p143, %p144
      %p147 = scmp.ne.s32.totalorder %s132, %s146
      %p148 = scmp.eq.s32.totalorder %s24, 0
      %p149 = por %p147, %p148
      %s151 = sadd.s32 %s150, 1
      %p154 = scmp.eq.s32.totalorder %s18, 3
      %p155 = scmp.ne.s32.totalorder %s150, %s152
      %p156 = scmp.eq.s32.totalorder %s18, 0
      %p157 = por %p155, %p156
      %p158 = scmp.ne.s32.totalorder %s150, %s152
      %p159 = scmp.eq.s32.totalorder %s23, 3
      %p160 = por %p158, %p159
      %p161 = scmp.ne.s32.totalorder %s152, %s153
      %p162 = scmp.eq.s32.totalorder %s23, 0
      %p163 = por %p161, %p162
      %p164 = scmp.ne.s32.totalorder %s152, %s153
      %p165 = scmp.eq.s32.totalorder %s24, 3
      %p166 = por %p164, %p165
      %p168 = scmp.ne.s32.totalorder %s153, %s167
      %p169 = scmp.eq.s32.totalorder %s24, 0
      %p170 = por %p168, %p169
      %s172 = sadd.s32 %s171, 1
      %p175 = scmp.eq.s32.totalorder %s18, 3
      %p176 = scmp.ne.s32.totalorder %s171, %s173
      %p177 = scmp.eq.s32.totalorder %s18, 0
      %p178 = por %p176, %p177
      %p179 = scmp.ne.s32.totalorder %s171, %s173
      %p180 = scmp.eq.s32.totalorder %s23, 3
      %p181 = por %p179, %p180
      %p182 = scmp.ne.s32.totalorder %s173, %s174
      %p183 = scmp.eq.s32.totalorder %s23, 0
      %p184 = por %p182, %p183
      %p185 = scmp.ne.s32.totalorder %s173, %s174
      %p186 = scmp.eq.s32.totalorder %s24, 3
      %p187 = por %p185, %p186
      %p189 = scmp.ne.s32.totalorder %s174, %s188
      %p190 = scmp.eq.s32.totalorder %s24, 0
      %p191 = por %p189, %p190
      %s193 = sadd.s32 %s192, 1
      %p196 = scmp.eq.s32.totalorder %s18, 3
      %p197 = scmp.ne.s32.totalorder %s192, %s194
      %p198 = scmp.eq.s32.totalorder %s18, 0
      %p199 = por %p197, %p198
      %p200 = scmp.ne.s32.totalorder %s192, %s194
      %p201 = scmp.eq.s32.totalorder %s23, 3
      %p202 = por %p200, %p201
      %p203 = scmp.ne.s32.totalorder %s194, %s195
      %p204 = scmp.eq.s32.totalorder %s23, 0
      %p205 = por %p203, %p204
      %p206 = scmp.ne.s32.totalorder %s194, %s195
      %p207 = scmp.eq.s32.totalorder %s24, 3
      %p208 = por %p206, %p207
      %p210 = scmp.ne.s32.totalorder %s195, %s209
      %p211 = scmp.eq.s32.totalorder %s24, 0
      %p212 = por %p210, %p211
      %s214 = sadd.s32 %s213, 1
      %p217 = scmp.eq.s32.totalorder %s18, 3
      %p218 = scmp.ne.s32.totalorder %s213, %s215
      %p219 = scmp.eq.s32.totalorder %s18, 0
      %p220 = por %p218, %p219
      %p221 = scmp.ne.s32.totalorder %s213, %s215
      %p222 = scmp.eq.s32.totalorder %s23, 3
      %p223 = por %p221, %p222
      %p224 = scmp.ne.s32.totalorder %s215, %s216
      %p225 = scmp.eq.s32.totalorder %s23, 0
      %p226 = por %p224, %p225
      %p227 = scmp.ne.s32.totalorder %s215, %s216
      %p228 = scmp.eq.s32.totalorder %s24, 3
      %p229 = por %p227, %p228
      %p231 = scmp.ne.s32.totalorder %s216, %s230
      %p232 = scmp.eq.s32.totalorder %s24, 0
      %p233 = por %p231, %p232
      %s234 = ssub.s32 %s25, %s37
      %p235 = scmp.eq.s32.totalorder %s234, 0
      %s237 = sadd.s32 %s236, 1
      %s238 = scalar_select %p235, %s236, %s237
      %p241 = pneg %p235
      %p242 = scmp.eq.s32.totalorder %s18, 3
      %p243 = por %p241, %p242
      %p244 = scmp.ne.s32.totalorder %s236, %s239
      %p245 = scmp.eq.s32.totalorder %s18, 0
      %p246 = por %p244, %p245
      %p247 = scmp.ne.s32.totalorder %s236, %s239
      %p248 = scmp.eq.s32.totalorder %s23, 3
      %p249 = por %p247, %p248
      %p250 = scmp.ne.s32.totalorder %s239, %s240
      %p251 = scmp.eq.s32.totalorder %s23, 0
      %p252 = por %p250, %p251
      %p253 = scmp.ne.s32.totalorder %s239, %s240
      %p254 = scmp.eq.s32.totalorder %s24, 3
      %p255 = por %p253, %p254
      %p257 = scmp.ne.s32.totalorder %s240, %s256
      %p258 = scmp.eq.s32.totalorder %s24, 0
      %p259 = por %p257, %p258
      %p260 = scmp.le.s32.totalorder 1, %s18
      %p261 = scmp.lt.s32.totalorder %s18, 5
      %p262 = pnand %p260, %p261
      %p263 = pneg %p262
      // Predicated region
      $region9: #{tpu_custom_call.1} parent=5 // pred_check
        _
      $region10: #{tpu_custom_call.1} parent=5 // pred_check_branch
        %265 = sbr.rel (%p262) target = $region12
      $region11: #{tpu_custom_call.1} parent=5 // pred_region
        %s266 = ssub.s32 %s18, 1
        // Predicated region
        $region13: #{tpu_custom_call.1} parent=11 // pred_check
          %p267 = pneg %p79
        $region14: #{tpu_custom_call.1} parent=11 // pred_check_branch
          %269 = sbr.rel (%p267) target = $region16
        $region15: #{tpu_custom_call.1} parent=11 // pred_region
          _
        $region16: #{tpu_custom_call.1} parent=11 // pred_fallthru
          _
        // Predicated region
        $region17: #{tpu_custom_call.1} parent=11 // pred_check
          %p270 = pneg %p100
        $region18: #{tpu_custom_call.1} parent=11 // pred_check_branch
          %272 = sbr.rel (%p270) target = $region20
        $region19: #{tpu_custom_call.1} parent=11 // pred_region
          _
        $region20: #{tpu_custom_call.1} parent=11 // pred_fallthru
          _
        // Predicated region
        $region21: #{tpu_custom_call.1} parent=11 // pred_check
          %p273 = pneg %p121
        $region22: #{tpu_custom_call.1} parent=11 // pred_check_branch
          %275 = sbr.rel (%p273) target = $region24
        $region23: #{tpu_custom_call.1} parent=11 // pred_region
          _
        $region24: #{tpu_custom_call.1} parent=11 // pred_fallthru
          _
        // Predicated region
        $region25: #{tpu_custom_call.1} parent=11 // pred_check
          %p276 = pneg %p142
        $region26: #{tpu_custom_call.1} parent=11 // pred_check_branch
          %278 = sbr.rel (%p276) target = $region28
        $region27: #{tpu_custom_call.1} parent=11 // pred_region
          _
        $region28: #{tpu_custom_call.1} parent=11 // pred_fallthru
          _
        // Predicated region
        $region29: #{tpu_custom_call.1} parent=11 // pred_check
          %p279 = pneg %p163
        $region30: #{tpu_custom_call.1} parent=11 // pred_check_branch
          %281 = sbr.rel (%p279) target = $region32
        $region31: #{tpu_custom_call.1} parent=11 // pred_region
          _
        $region32: #{tpu_custom_call.1} parent=11 // pred_fallthru
          _
        // Predicated region
        $region33: #{tpu_custom_call.1} parent=11 // pred_check
          %p282 = pneg %p184
        $region34: #{tpu_custom_call.1} parent=11 // pred_check_branch
          %284 = sbr.rel (%p282) target = $region36
        $region35: #{tpu_custom_call.1} parent=11 // pred_region
          _
        $region36: #{tpu_custom_call.1} parent=11 // pred_fallthru
          _
        // Predicated region
        $region37: #{tpu_custom_call.1} parent=11 // pred_check
          %p285 = pneg %p205
        $region38: #{tpu_custom_call.1} parent=11 // pred_check_branch
          %287 = sbr.rel (%p285) target = $region40
        $region39: #{tpu_custom_call.1} parent=11 // pred_region
          _
        $region40: #{tpu_custom_call.1} parent=11 // pred_fallthru
          _
        // Predicated region
        $region41: #{tpu_custom_call.1} parent=11 // pred_check
          %p288 = pneg %p226
        $region42: #{tpu_custom_call.1} parent=11 // pred_check_branch
          %290 = sbr.rel (%p288) target = $region44
        $region43: #{tpu_custom_call.1} parent=11 // pred_region
          _
        $region44: #{tpu_custom_call.1} parent=11 // pred_fallthru
          _
      $region12: #{tpu_custom_call.1} parent=5 // pred_fallthru
        _
      %p291 = scmp.lt.s32.totalorder %s18, 4
      // Predicated region
      $region45: #{tpu_custom_call.1} parent=5 // pred_check
        %p292 = pneg %p291
      $region46: #{tpu_custom_call.1} parent=5 // pred_check_branch
        %294 = sbr.rel (%p292) target = $region48
      $region47: #{tpu_custom_call.1} parent=5 // pred_region
        // Predicated region
        $region49: #{tpu_custom_call.1} parent=47 // pred_check
          %p295 = pneg %p52
        $region50: #{tpu_custom_call.1} parent=47 // pred_check_branch
          %297 = sbr.rel (%p295) target = $region52
        $region51: #{tpu_custom_call.1} parent=47 // pred_region
          %s298 = sand.u32 %s42, 1
          %s299 = sand.u32 %s42, 1
          %s300 = smul.addr %s299, 512
          %s301 = scalar_lea.vmem [#allocation3], %s300
          %s302 = smul.u32 4, %s25
          %s303 = smul.u32 16, %s26
          %s304 = smul.addr %s302, 64
          %s305 = sadd.s32 %s303, %s304
          %s306 = smul.addr %s305, 4
          %s307 = scalar_lea.vmem %s0, %s306
          // Predicated region
          $region53: #{tpu_custom_call.1} parent=51 // pred_check
            _
          $region54: #{tpu_custom_call.1} parent=51 // pred_check_branch
            %309 = sbr.rel (0) target = $region56
          $region55: #{tpu_custom_call.1} parent=51 // pred_region
            // Predicated region
            $region57: #{tpu_custom_call.1} parent=55 // pred_check
              _
            $region58: #{tpu_custom_call.1} parent=55 // pred_check_branch
              %311 = sbr.rel target = $region60
            $region59: #{tpu_custom_call.1} parent=55 // pred_region
              // Predicated region
              $region72: #{tpu_custom_call.1} parent=59 // pred_check
                _
              $region73: #{tpu_custom_call.1} parent=59 // pred_check_branch
                %580 = sbr.rel (0) target = $region75
              $region74: #{tpu_custom_call.1} parent=59 // pred_region
                loop: start=0, step=1, limit=1
                $region76: #{tpu_custom_call.1} parent=74 // loop_pre_header
                  _
                $region77: #{tpu_custom_call.1} parent=74 // loop_header
                  %s582 = sphi 0, %s586
                  %p583 = scmp.ge.s32.totalorder %s582, 1
                  %s587 = sphi %s307, %s307
                  %s588 = sphi %s301, %s301
                $region78: #{tpu_custom_call.1} parent=74 // loop_header_branch
                  %585 = sbr.rel (%p583) target = $region82
                $region79: #{tpu_custom_call.1} parent=74 // loop_body
                  _
                $region80: #{tpu_custom_call.1} parent=74 // loop_footer
                  %s586 = sadd.s32 1, %s582
                $region81: #{tpu_custom_call.1} parent=74 // loop_footer_branch
                  %581 = sbr.rel target = $region77
                $region82: #{tpu_custom_call.1} parent=74 // loop_exit
                  _
                loop: start=0, step=1, limit=1
                $region83: #{tpu_custom_call.1} parent=74 // loop_pre_header
                  _
                $region84: #{tpu_custom_call.1} parent=74 // loop_header
                  %s591 = sphi 0, %s595
                  %p592 = scmp.ge.s32.totalorder %s591, 1
                  %s596 = sphi %s307, %s307
                  %s597 = sphi %s301, %s301
                $region85: #{tpu_custom_call.1} parent=74 // loop_header_branch
                  %594 = sbr.rel (%p592) target = $region89
                $region86: #{tpu_custom_call.1} parent=74 // loop_body
                  %v598 = vld [vmem:[%s596] sm:$0xf]
                  %599 = vst [vmem:[%s597] sm:$0xf] %v598
                  %v600 = vld [vmem:[%s596 + $0x4] sm:$0xf]
                  %601 = vst [vmem:[%s597 + $0x4] sm:$0xf] %v600
                  %v602 = vld [vmem:[%s596 + $0x8] sm:$0xf]
                  %603 = vst [vmem:[%s597 + $0x8] sm:$0xf] %v602
                  %v604 = vld [vmem:[%s596 + $0xc] sm:$0xf]
                  %605 = vst [vmem:[%s597 + $0xc] sm:$0xf] %v604
                  %v606 = vld [vmem:[%s596 + $0x10] sm:$0xf]
                  %607 = vst [vmem:[%s597 + $0x10] sm:$0xf] %v606
                  %v608 = vld [vmem:[%s596 + $0x14] sm:$0xf]
                  %609 = vst [vmem:[%s597 + $0x14] sm:$0xf] %v608
                  %v610 = vld [vmem:[%s596 + $0x18] sm:$0xf]
                  %611 = vst [vmem:[%s597 + $0x18] sm:$0xf] %v610
                  %v612 = vld [vmem:[%s596 + $0x1c] sm:$0xf]
                  %613 = vst [vmem:[%s597 + $0x1c] sm:$0xf] %v612
                  %v614 = vld [vmem:[%s596 + $0x20] sm:$0xf]
                  %615 = vst [vmem:[%s597 + $0x20] sm:$0xf] %v614
                  %v616 = vld [vmem:[%s596 + $0x24] sm:$0xf]
                  %617 = vst [vmem:[%s597 + $0x24] sm:$0xf] %v616
                  %v618 = vld [vmem:[%s596 + $0x28] sm:$0xf]
                  %619 = vst [vmem:[%s597 + $0x28] sm:$0xf] %v618
                  %v620 = vld [vmem:[%s596 + $0x2c] sm:$0xf]
                  %621 = vst [vmem:[%s597 + $0x2c] sm:$0xf] %v620
                  %v622 = vld [vmem:[%s596 + $0x30] sm:$0xf]
                  %623 = vst [vmem:[%s597 + $0x30] sm:$0xf] %v622
                  %v624 = vld [vmem:[%s596 + $0x34] sm:$0xf]
                  %625 = vst [vmem:[%s597 + $0x34] sm:$0xf] %v624
                  %v626 = vld [vmem:[%s596 + $0x38] sm:$0xf]
                  %627 = vst [vmem:[%s597 + $0x38] sm:$0xf] %v626
                  %v628 = vld [vmem:[%s596 + $0x3c] sm:$0xf]
                  %629 = vst [vmem:[%s597 + $0x3c] sm:$0xf] %v628
                  %v630 = vld [vmem:[%s596 + $0x80] sm:$0xf]
                  %631 = vst [vmem:[%s597 + $0x40] sm:$0xf] %v630
                  %v632 = vld [vmem:[%s596 + $0x84] sm:$0xf]
                  %633 = vst [vmem:[%s597 + $0x44] sm:$0xf] %v632
                  %v634 = vld [vmem:[%s596 + $0x88] sm:$0xf]
                  %635 = vst [vmem:[%s597 + $0x48] sm:$0xf] %v634
                  %v636 = vld [vmem:[%s596 + $0x8c] sm:$0xf]
                  %637 = vst [vmem:[%s597 + $0x4c] sm:$0xf] %v636
                  %v638 = vld [vmem:[%s596 + $0x90] sm:$0xf]
                  %639 = vst [vmem:[%s597 + $0x50] sm:$0xf] %v638
                  %v640 = vld [vmem:[%s596 + $0x94] sm:$0xf]
                  %641 = vst [vmem:[%s597 + $0x54] sm:$0xf] %v640
                  %v642 = vld [vmem:[%s596 + $0x98] sm:$0xf]
                  %643 = vst [vmem:[%s597 + $0x58] sm:$0xf] %v642
                  %v644 = vld [vmem:[%s596 + $0x9c] sm:$0xf]
                  %645 = vst [vmem:[%s597 + $0x5c] sm:$0xf] %v644
                  %v646 = vld [vmem:[%s596 + $0xa0] sm:$0xf]
                  %647 = vst [vmem:[%s597 + $0x60] sm:$0xf] %v646
                  %v648 = vld [vmem:[%s596 + $0xa4] sm:$0xf]
                  %649 = vst [vmem:[%s597 + $0x64] sm:$0xf] %v648
                  %v650 = vld [vmem:[%s596 + $0xa8] sm:$0xf]
                  %651 = vst [vmem:[%s597 + $0x68] sm:$0xf] %v650
                  %v652 = vld [vmem:[%s596 + $0xac] sm:$0xf]
                  %653 = vst [vmem:[%s597 + $0x6c] sm:$0xf] %v652
                  %v654 = vld [vmem:[%s596 + $0xb0] sm:$0xf]
                  %655 = vst [vmem:[%s597 + $0x70] sm:$0xf] %v654
                  %v656 = vld [vmem:[%s596 + $0xb4] sm:$0xf]
                  %657 = vst [vmem:[%s597 + $0x74] sm:$0xf] %v656
                  %v658 = vld [vmem:[%s596 + $0xb8] sm:$0xf]
                  %659 = vst [vmem:[%s597 + $0x78] sm:$0xf] %v658
                  %v660 = vld [vmem:[%s596 + $0xbc] sm:$0xf]
                  %661 = vst [vmem:[%s597 + $0x7c] sm:$0xf] %v660
                  %v662 = vld [vmem:[%s596 + $0x100] sm:$0xf]
                  %663 = vst [vmem:[%s597 + $0x80] sm:$0xf] %v662
                  %v664 = vld [vmem:[%s596 + $0x104] sm:$0xf]
                  %665 = vst [vmem:[%s597 + $0x84] sm:$0xf] %v664
                  %v666 = vld [vmem:[%s596 + $0x108] sm:$0xf]
                  %667 = vst [vmem:[%s597 + $0x88] sm:$0xf] %v666
                  %v668 = vld [vmem:[%s596 + $0x10c] sm:$0xf]
                  %669 = vst [vmem:[%s597 + $0x8c] sm:$0xf] %v668
                  %v670 = vld [vmem:[%s596 + $0x110] sm:$0xf]
                  %671 = vst [vmem:[%s597 + $0x90] sm:$0xf] %v670
                  %v672 = vld [vmem:[%s596 + $0x114] sm:$0xf]
                  %673 = vst [vmem:[%s597 + $0x94] sm:$0xf] %v672
                  %v674 = vld [vmem:[%s596 + $0x118] sm:$0xf]
                  %675 = vst [vmem:[%s597 + $0x98] sm:$0xf] %v674
                  %v676 = vld [vmem:[%s596 + $0x11c] sm:$0xf]
                  %677 = vst [vmem:[%s597 + $0x9c] sm:$0xf] %v676
                  %v678 = vld [vmem:[%s596 + $0x120] sm:$0xf]
                  %679 = vst [vmem:[%s597 + $0xa0] sm:$0xf] %v678
                  %v680 = vld [vmem:[%s596 + $0x124] sm:$0xf]
                  %681 = vst [vmem:[%s597 + $0xa4] sm:$0xf] %v680
                  %v682 = vld [vmem:[%s596 + $0x128] sm:$0xf]
                  %683 = vst [vmem:[%s597 + $0xa8] sm:$0xf] %v682
                  %v684 = vld [vmem:[%s596 + $0x12c] sm:$0xf]
                  %685 = vst [vmem:[%s597 + $0xac] sm:$0xf] %v684
                  %v686 = vld [vmem:[%s596 + $0x130] sm:$0xf]
                  %687 = vst [vmem:[%s597 + $0xb0] sm:$0xf] %v686
                  %v688 = vld [vmem:[%s596 + $0x134] sm:$0xf]
                  %689 = vst [vmem:[%s597 + $0xb4] sm:$0xf] %v688
                  %v690 = vld [vmem:[%s596 + $0x138] sm:$0xf]
                  %691 = vst [vmem:[%s597 + $0xb8] sm:$0xf] %v690
                  %v692 = vld [vmem:[%s596 + $0x13c] sm:$0xf]
                  %693 = vst [vmem:[%s597 + $0xbc] sm:$0xf] %v692
                  %v694 = vld [vmem:[%s596 + $0x180] sm:$0xf]
                  %695 = vst [vmem:[%s597 + $0xc0] sm:$0xf] %v694
                  %v696 = vld [vmem:[%s596 + $0x184] sm:$0xf]
                  %697 = vst [vmem:[%s597 + $0xc4] sm:$0xf] %v696
                  %v698 = vld [vmem:[%s596 + $0x188] sm:$0xf]
                  %699 = vst [vmem:[%s597 + $0xc8] sm:$0xf] %v698
                  %v700 = vld [vmem:[%s596 + $0x18c] sm:$0xf]
                  %701 = vst [vmem:[%s597 + $0xcc] sm:$0xf] %v700
                  %v702 = vld [vmem:[%s596 + $0x190] sm:$0xf]
                  %703 = vst [vmem:[%s597 + $0xd0] sm:$0xf] %v702
                  %v704 = vld [vmem:[%s596 + $0x194] sm:$0xf]
                  %705 = vst [vmem:[%s597 + $0xd4] sm:$0xf] %v704
                  %v706 = vld [vmem:[%s596 + $0x198] sm:$0xf]
                  %707 = vst [vmem:[%s597 + $0xd8] sm:$0xf] %v706
                  %v708 = vld [vmem:[%s596 + $0x19c] sm:$0xf]
                  %709 = vst [vmem:[%s597 + $0xdc] sm:$0xf] %v708
                  %v710 = vld [vmem:[%s596 + $0x1a0] sm:$0xf]
                  %711 = vst [vmem:[%s597 + $0xe0] sm:$0xf] %v710
                  %v712 = vld [vmem:[%s596 + $0x1a4] sm:$0xf]
                  %713 = vst [vmem:[%s597 + $0xe4] sm:$0xf] %v712
                  %v714 = vld [vmem:[%s596 + $0x1a8] sm:$0xf]
                  %715 = vst [vmem:[%s597 + $0xe8] sm:$0xf] %v714
                  %v716 = vld [vmem:[%s596 + $0x1ac] sm:$0xf]
                  %717 = vst [vmem:[%s597 + $0xec] sm:$0xf] %v716
                  %v718 = vld [vmem:[%s596 + $0x1b0] sm:$0xf]
                  %719 = vst [vmem:[%s597 + $0xf0] sm:$0xf] %v718
                  %v720 = vld [vmem:[%s596 + $0x1b4] sm:$0xf]
                  %721 = vst [vmem:[%s597 + $0xf4] sm:$0xf] %v720
                  %v722 = vld [vmem:[%s596 + $0x1b8] sm:$0xf]
                  %723 = vst [vmem:[%s597 + $0xf8] sm:$0xf] %v722
                  %v724 = vld [vmem:[%s596 + $0x1bc] sm:$0xf]
                  %725 = vst [vmem:[%s597 + $0xfc] sm:$0xf] %v724
                  %v726 = vld [vmem:[%s596 + $0x200] sm:$0xf]
                  %727 = vst [vmem:[%s597 + $0x100] sm:$0xf] %v726
                  %v728 = vld [vmem:[%s596 + $0x204] sm:$0xf]
                  %729 = vst [vmem:[%s597 + $0x104] sm:$0xf] %v728
                  %v730 = vld [vmem:[%s596 + $0x208] sm:$0xf]
                  %731 = vst [vmem:[%s597 + $0x108] sm:$0xf] %v730
                  %v732 = vld [vmem:[%s596 + $0x20c] sm:$0xf]
                  %733 = vst [vmem:[%s597 + $0x10c] sm:$0xf] %v732
                  %v734 = vld [vmem:[%s596 + $0x210] sm:$0xf]
                  %735 = vst [vmem:[%s597 + $0x110] sm:$0xf] %v734
                  %v736 = vld [vmem:[%s596 + $0x214] sm:$0xf]
                  %737 = vst [vmem:[%s597 + $0x114] sm:$0xf] %v736
                  %v738 = vld [vmem:[%s596 + $0x218] sm:$0xf]
                  %739 = vst [vmem:[%s597 + $0x118] sm:$0xf] %v738
                  %v740 = vld [vmem:[%s596 + $0x21c] sm:$0xf]
                  %741 = vst [vmem:[%s597 + $0x11c] sm:$0xf] %v740
                  %v742 = vld [vmem:[%s596 + $0x220] sm:$0xf]
                  %743 = vst [vmem:[%s597 + $0x120] sm:$0xf] %v742
                  %v744 = vld [vmem:[%s596 + $0x224] sm:$0xf]
                  %745 = vst [vmem:[%s597 + $0x124] sm:$0xf] %v744
                  %v746 = vld [vmem:[%s596 + $0x228] sm:$0xf]
                  %747 = vst [vmem:[%s597 + $0x128] sm:$0xf] %v746
                  %v748 = vld [vmem:[%s596 + $0x22c] sm:$0xf]
                  %749 = vst [vmem:[%s597 + $0x12c] sm:$0xf] %v748
                  %v750 = vld [vmem:[%s596 + $0x230] sm:$0xf]
                  %751 = vst [vmem:[%s597 + $0x130] sm:$0xf] %v750
                  %v752 = vld [vmem:[%s596 + $0x234] sm:$0xf]
                  %753 = vst [vmem:[%s597 + $0x134] sm:$0xf] %v752
                  %v754 = vld [vmem:[%s596 + $0x238] sm:$0xf]
                  %755 = vst [vmem:[%s597 + $0x138] sm:$0xf] %v754
                  %v756 = vld [vmem:[%s596 + $0x23c] sm:$0xf]
                  %757 = vst [vmem:[%s597 + $0x13c] sm:$0xf] %v756
                  %v758 = vld [vmem:[%s596 + $0x280] sm:$0xf]
                  %759 = vst [vmem:[%s597 + $0x140] sm:$0xf] %v758
                  %v760 = vld [vmem:[%s596 + $0x284] sm:$0xf]
                  %761 = vst [vmem:[%s597 + $0x144] sm:$0xf] %v760
                  %v762 = vld [vmem:[%s596 + $0x288] sm:$0xf]
                  %763 = vst [vmem:[%s597 + $0x148] sm:$0xf] %v762
                  %v764 = vld [vmem:[%s596 + $0x28c] sm:$0xf]
                  %765 = vst [vmem:[%s597 + $0x14c] sm:$0xf] %v764
                  %v766 = vld [vmem:[%s596 + $0x290] sm:$0xf]
                  %767 = vst [vmem:[%s597 + $0x150] sm:$0xf] %v766
                  %v768 = vld [vmem:[%s596 + $0x294] sm:$0xf]
                  %769 = vst [vmem:[%s597 + $0x154] sm:$0xf] %v768
                  %v770 = vld [vmem:[%s596 + $0x298] sm:$0xf]
                  %771 = vst [vmem:[%s597 + $0x158] sm:$0xf] %v770
                  %v772 = vld [vmem:[%s596 + $0x29c] sm:$0xf]
                  %773 = vst [vmem:[%s597 + $0x15c] sm:$0xf] %v772
                  %v774 = vld [vmem:[%s596 + $0x2a0] sm:$0xf]
                  %775 = vst [vmem:[%s597 + $0x160] sm:$0xf] %v774
                  %v776 = vld [vmem:[%s596 + $0x2a4] sm:$0xf]
                  %777 = vst [vmem:[%s597 + $0x164] sm:$0xf] %v776
                  %v778 = vld [vmem:[%s596 + $0x2a8] sm:$0xf]
                  %779 = vst [vmem:[%s597 + $0x168] sm:$0xf] %v778
                  %v780 = vld [vmem:[%s596 + $0x2ac] sm:$0xf]
                  %781 = vst [vmem:[%s597 + $0x16c] sm:$0xf] %v780
                  %v782 = vld [vmem:[%s596 + $0x2b0] sm:$0xf]
                  %783 = vst [vmem:[%s597 + $0x170] sm:$0xf] %v782
                  %v784 = vld [vmem:[%s596 + $0x2b4] sm:$0xf]
                  %785 = vst [vmem:[%s597 + $0x174] sm:$0xf] %v784
                  %v786 = vld [vmem:[%s596 + $0x2b8] sm:$0xf]
                  %787 = vst [vmem:[%s597 + $0x178] sm:$0xf] %v786
                  %v788 = vld [vmem:[%s596 + $0x2bc] sm:$0xf]
                  %789 = vst [vmem:[%s597 + $0x17c] sm:$0xf] %v788
                  %v790 = vld [vmem:[%s596 + $0x300] sm:$0xf]
                  %791 = vst [vmem:[%s597 + $0x180] sm:$0xf] %v790
                  %v792 = vld [vmem:[%s596 + $0x304] sm:$0xf]
                  %793 = vst [vmem:[%s597 + $0x184] sm:$0xf] %v792
                  %v794 = vld [vmem:[%s596 + $0x308] sm:$0xf]
                  %795 = vst [vmem:[%s597 + $0x188] sm:$0xf] %v794
                  %v796 = vld [vmem:[%s596 + $0x30c] sm:$0xf]
                  %797 = vst [vmem:[%s597 + $0x18c] sm:$0xf] %v796
                  %v798 = vld [vmem:[%s596 + $0x310] sm:$0xf]
                  %799 = vst [vmem:[%s597 + $0x190] sm:$0xf] %v798
                  %v800 = vld [vmem:[%s596 + $0x314] sm:$0xf]
                  %801 = vst [vmem:[%s597 + $0x194] sm:$0xf] %v800
                  %v802 = vld [vmem:[%s596 + $0x318] sm:$0xf]
                  %803 = vst [vmem:[%s597 + $0x198] sm:$0xf] %v802
                  %v804 = vld [vmem:[%s596 + $0x31c] sm:$0xf]
                  %805 = vst [vmem:[%s597 + $0x19c] sm:$0xf] %v804
                  %v806 = vld [vmem:[%s596 + $0x320] sm:$0xf]
                  %807 = vst [vmem:[%s597 + $0x1a0] sm:$0xf] %v806
                  %v808 = vld [vmem:[%s596 + $0x324] sm:$0xf]
                  %809 = vst [vmem:[%s597 + $0x1a4] sm:$0xf] %v808
                  %v810 = vld [vmem:[%s596 + $0x328] sm:$0xf]
                  %811 = vst [vmem:[%s597 + $0x1a8] sm:$0xf] %v810
                  %v812 = vld [vmem:[%s596 + $0x32c] sm:$0xf]
                  %813 = vst [vmem:[%s597 + $0x1ac] sm:$0xf] %v812
                  %v814 = vld [vmem:[%s596 + $0x330] sm:$0xf]
                  %815 = vst [vmem:[%s597 + $0x1b0] sm:$0xf] %v814
                  %v816 = vld [vmem:[%s596 + $0x334] sm:$0xf]
                  %817 = vst [vmem:[%s597 + $0x1b4] sm:$0xf] %v816
                  %v818 = vld [vmem:[%s596 + $0x338] sm:$0xf]
                  %819 = vst [vmem:[%s597 + $0x1b8] sm:$0xf] %v818
                  %v820 = vld [vmem:[%s596 + $0x33c] sm:$0xf]
                  %821 = vst [vmem:[%s597 + $0x1bc] sm:$0xf] %v820
                  %v822 = vld [vmem:[%s596 + $0x380] sm:$0xf]
                  %823 = vst [vmem:[%s597 + $0x1c0] sm:$0xf] %v822
                  %v824 = vld [vmem:[%s596 + $0x384] sm:$0xf]
                  %825 = vst [vmem:[%s597 + $0x1c4] sm:$0xf] %v824
                  %v826 = vld [vmem:[%s596 + $0x388] sm:$0xf]
                  %827 = vst [vmem:[%s597 + $0x1c8] sm:$0xf] %v826
                  %v828 = vld [vmem:[%s596 + $0x38c] sm:$0xf]
                  %829 = vst [vmem:[%s597 + $0x1cc] sm:$0xf] %v828
                  %v830 = vld [vmem:[%s596 + $0x390] sm:$0xf]
                  %831 = vst [vmem:[%s597 + $0x1d0] sm:$0xf] %v830
                  %v832 = vld [vmem:[%s596 + $0x394] sm:$0xf]
                  %833 = vst [vmem:[%s597 + $0x1d4] sm:$0xf] %v832
                  %v834 = vld [vmem:[%s596 + $0x398] sm:$0xf]
                  %835 = vst [vmem:[%s597 + $0x1d8] sm:$0xf] %v834
                  %v836 = vld [vmem:[%s596 + $0x39c] sm:$0xf]
                  %837 = vst [vmem:[%s597 + $0x1dc] sm:$0xf] %v836
                  %v838 = vld [vmem:[%s596 + $0x3a0] sm:$0xf]
                  %839 = vst [vmem:[%s597 + $0x1e0] sm:$0xf] %v838
                  %v840 = vld [vmem:[%s596 + $0x3a4] sm:$0xf]
                  %841 = vst [vmem:[%s597 + $0x1e4] sm:$0xf] %v840
                  %v842 = vld [vmem:[%s596 + $0x3a8] sm:$0xf]
                  %843 = vst [vmem:[%s597 + $0x1e8] sm:$0xf] %v842
                  %v844 = vld [vmem:[%s596 + $0x3ac] sm:$0xf]
                  %845 = vst [vmem:[%s597 + $0x1ec] sm:$0xf] %v844
                  %v846 = vld [vmem:[%s596 + $0x3b0] sm:$0xf]
                  %847 = vst [vmem:[%s597 + $0x1f0] sm:$0xf] %v846
                  %v848 = vld [vmem:[%s596 + $0x3b4] sm:$0xf]
                  %849 = vst [vmem:[%s597 + $0x1f4] sm:$0xf] %v848
                  %v850 = vld [vmem:[%s596 + $0x3b8] sm:$0xf]
                  %851 = vst [vmem:[%s597 + $0x1f8] sm:$0xf] %v850
                  %v852 = vld [vmem:[%s596 + $0x3bc] sm:$0xf]
                  %853 = vst [vmem:[%s597 + $0x1fc] sm:$0xf] %v852
                $region87: #{tpu_custom_call.1} parent=74 // loop_footer
                  %s595 = sadd.s32 1, %s591
                $region88: #{tpu_custom_call.1} parent=74 // loop_footer_branch
                  %590 = sbr.rel target = $region84
                $region89: #{tpu_custom_call.1} parent=74 // loop_exit
                  _
              $region75: #{tpu_custom_call.1} parent=59 // pred_fallthru
                _
            $region60: #{tpu_custom_call.1} parent=55 // pred_fallthru
              _
            // Predicated region
            $region61: #{tpu_custom_call.1} parent=55 // pred_check
              _
            $region62: #{tpu_custom_call.1} parent=55 // pred_check_branch
              %313 = sbr.rel (0) target = $region64
            $region63: #{tpu_custom_call.1} parent=55 // pred_region
              loop: start=0, step=1, limit=1
              $region65: #{tpu_custom_call.1} parent=63 // loop_pre_header
                _
              $region66: #{tpu_custom_call.1} parent=63 // loop_header
                %s316 = sphi 0, %s320
                %p317 = scmp.ge.s32.totalorder %s316, 1
                %s321 = sphi %s307, %s307
                %s322 = sphi %s301, %s301
              $region67: #{tpu_custom_call.1} parent=63 // loop_header_branch
                %319 = sbr.rel (%p317) target = $region71
              $region68: #{tpu_custom_call.1} parent=63 // loop_body
                %v323 = vld [vmem:[%s321] sm:$0xf]
                %324 = vst [vmem:[%s322] sm:$0xf] %v323
                %v325 = vld [vmem:[%s321 + $0x4] sm:$0xf]
                %326 = vst [vmem:[%s322 + $0x4] sm:$0xf] %v325
                %v327 = vld [vmem:[%s321 + $0x8] sm:$0xf]
                %328 = vst [vmem:[%s322 + $0x8] sm:$0xf] %v327
                %v329 = vld [vmem:[%s321 + $0xc] sm:$0xf]
                %330 = vst [vmem:[%s322 + $0xc] sm:$0xf] %v329
                %v331 = vld [vmem:[%s321 + $0x10] sm:$0xf]
                %332 = vst [vmem:[%s322 + $0x10] sm:$0xf] %v331
                %v333 = vld [vmem:[%s321 + $0x14] sm:$0xf]
                %334 = vst [vmem:[%s322 + $0x14] sm:$0xf] %v333
                %v335 = vld [vmem:[%s321 + $0x18] sm:$0xf]
                %336 = vst [vmem:[%s322 + $0x18] sm:$0xf] %v335
                %v337 = vld [vmem:[%s321 + $0x1c] sm:$0xf]
                %338 = vst [vmem:[%s322 + $0x1c] sm:$0xf] %v337
                %v339 = vld [vmem:[%s321 + $0x20] sm:$0xf]
                %340 = vst [vmem:[%s322 + $0x20] sm:$0xf] %v339
                %v341 = vld [vmem:[%s321 + $0x24] sm:$0xf]
                %342 = vst [vmem:[%s322 + $0x24] sm:$0xf] %v341
                %v343 = vld [vmem:[%s321 + $0x28] sm:$0xf]
                %344 = vst [vmem:[%s322 + $0x28] sm:$0xf] %v343
                %v345 = vld [vmem:[%s321 + $0x2c] sm:$0xf]
                %346 = vst [vmem:[%s322 + $0x2c] sm:$0xf] %v345
                %v347 = vld [vmem:[%s321 + $0x30] sm:$0xf]
                %348 = vst [vmem:[%s322 + $0x30] sm:$0xf] %v347
                %v349 = vld [vmem:[%s321 + $0x34] sm:$0xf]
                %350 = vst [vmem:[%s322 + $0x34] sm:$0xf] %v349
                %v351 = vld [vmem:[%s321 + $0x38] sm:$0xf]
                %352 = vst [vmem:[%s322 + $0x38] sm:$0xf] %v351
                %v353 = vld [vmem:[%s321 + $0x3c] sm:$0xf]
                %354 = vst [vmem:[%s322 + $0x3c] sm:$0xf] %v353
                %v355 = vld [vmem:[%s321 + $0x80] sm:$0xf]
                %356 = vst [vmem:[%s322 + $0x40] sm:$0xf] %v355
                %v357 = vld [vmem:[%s321 + $0x84] sm:$0xf]
                %358 = vst [vmem:[%s322 + $0x44] sm:$0xf] %v357
                %v359 = vld [vmem:[%s321 + $0x88] sm:$0xf]
                %360 = vst [vmem:[%s322 + $0x48] sm:$0xf] %v359
                %v361 = vld [vmem:[%s321 + $0x8c] sm:$0xf]
                %362 = vst [vmem:[%s322 + $0x4c] sm:$0xf] %v361
                %v363 = vld [vmem:[%s321 + $0x90] sm:$0xf]
                %364 = vst [vmem:[%s322 + $0x50] sm:$0xf] %v363
                %v365 = vld [vmem:[%s321 + $0x94] sm:$0xf]
                %366 = vst [vmem:[%s322 + $0x54] sm:$0xf] %v365
                %v367 = vld [vmem:[%s321 + $0x98] sm:$0xf]
                %368 = vst [vmem:[%s322 + $0x58] sm:$0xf] %v367
                %v369 = vld [vmem:[%s321 + $0x9c] sm:$0xf]
                %370 = vst [vmem:[%s322 + $0x5c] sm:$0xf] %v369
                %v371 = vld [vmem:[%s321 + $0xa0] sm:$0xf]
                %372 = vst [vmem:[%s322 + $0x60] sm:$0xf] %v371
                %v373 = vld [vmem:[%s321 + $0xa4] sm:$0xf]
                %374 = vst [vmem:[%s322 + $0x64] sm:$0xf] %v373
                %v375 = vld [vmem:[%s321 + $0xa8] sm:$0xf]
                %376 = vst [vmem:[%s322 + $0x68] sm:$0xf] %v375
                %v377 = vld [vmem:[%s321 + $0xac] sm:$0xf]
                %378 = vst [vmem:[%s322 + $0x6c] sm:$0xf] %v377
                %v379 = vld [vmem:[%s321 + $0xb0] sm:$0xf]
                %380 = vst [vmem:[%s322 + $0x70] sm:$0xf] %v379
                %v381 = vld [vmem:[%s321 + $0xb4] sm:$0xf]
                %382 = vst [vmem:[%s322 + $0x74] sm:$0xf] %v381
                %v383 = vld [vmem:[%s321 + $0xb8] sm:$0xf]
                %384 = vst [vmem:[%s322 + $0x78] sm:$0xf] %v383
                %v385 = vld [vmem:[%s321 + $0xbc] sm:$0xf]
                %386 = vst [vmem:[%s322 + $0x7c] sm:$0xf] %v385
                %v387 = vld [vmem:[%s321 + $0x100] sm:$0xf]
                %388 = vst [vmem:[%s322 + $0x80] sm:$0xf] %v387
                %v389 = vld [vmem:[%s321 + $0x104] sm:$0xf]
                %390 = vst [vmem:[%s322 + $0x84] sm:$0xf] %v389
                %v391 = vld [vmem:[%s321 + $0x108] sm:$0xf]
                %392 = vst [vmem:[%s322 + $0x88] sm:$0xf] %v391
                %v393 = vld [vmem:[%s321 + $0x10c] sm:$0xf]
                %394 = vst [vmem:[%s322 + $0x8c] sm:$0xf] %v393
                %v395 = vld [vmem:[%s321 + $0x110] sm:$0xf]
                %396 = vst [vmem:[%s322 + $0x90] sm:$0xf] %v395
                %v397 = vld [vmem:[%s321 + $0x114] sm:$0xf]
                %398 = vst [vmem:[%s322 + $0x94] sm:$0xf] %v397
                %v399 = vld [vmem:[%s321 + $0x118] sm:$0xf]
                %400 = vst [vmem:[%s322 + $0x98] sm:$0xf] %v399
                %v401 = vld [vmem:[%s321 + $0x11c] sm:$0xf]
                %402 = vst [vmem:[%s322 + $0x9c] sm:$0xf] %v401
                %v403 = vld [vmem:[%s321 + $0x120] sm:$0xf]
                %404 = vst [vmem:[%s322 + $0xa0] sm:$0xf] %v403
                %v405 = vld [vmem:[%s321 + $0x124] sm:$0xf]
                %406 = vst [vmem:[%s322 + $0xa4] sm:$0xf] %v405
                %v407 = vld [vmem:[%s321 + $0x128] sm:$0xf]
                %408 = vst [vmem:[%s322 + $0xa8] sm:$0xf] %v407
                %v409 = vld [vmem:[%s321 + $0x12c] sm:$0xf]
                %410 = vst [vmem:[%s322 + $0xac] sm:$0xf] %v409
                %v411 = vld [vmem:[%s321 + $0x130] sm:$0xf]
                %412 = vst [vmem:[%s322 + $0xb0] sm:$0xf] %v411
                %v413 = vld [vmem:[%s321 + $0x134] sm:$0xf]
                %414 = vst [vmem:[%s322 + $0xb4] sm:$0xf] %v413
                %v415 = vld [vmem:[%s321 + $0x138] sm:$0xf]
                %416 = vst [vmem:[%s322 + $0xb8] sm:$0xf] %v415
                %v417 = vld [vmem:[%s321 + $0x13c] sm:$0xf]
                %418 = vst [vmem:[%s322 + $0xbc] sm:$0xf] %v417
                %v419 = vld [vmem:[%s321 + $0x180] sm:$0xf]
                %420 = vst [vmem:[%s322 + $0xc0] sm:$0xf] %v419
                %v421 = vld [vmem:[%s321 + $0x184] sm:$0xf]
                %422 = vst [vmem:[%s322 + $0xc4] sm:$0xf] %v421
                %v423 = vld [vmem:[%s321 + $0x188] sm:$0xf]
                %424 = vst [vmem:[%s322 + $0xc8] sm:$0xf] %v423
                %v425 = vld [vmem:[%s321 + $0x18c] sm:$0xf]
                %426 = vst [vmem:[%s322 + $0xcc] sm:$0xf] %v425
                %v427 = vld [vmem:[%s321 + $0x190] sm:$0xf]
                %428 = vst [vmem:[%s322 + $0xd0] sm:$0xf] %v427
                %v429 = vld [vmem:[%s321 + $0x194] sm:$0xf]
                %430 = vst [vmem:[%s322 + $0xd4] sm:$0xf] %v429
                %v431 = vld [vmem:[%s321 + $0x198] sm:$0xf]
                %432 = vst [vmem:[%s322 + $0xd8] sm:$0xf] %v431
                %v433 = vld [vmem:[%s321 + $0x19c] sm:$0xf]
                %434 = vst [vmem:[%s322 + $0xdc] sm:$0xf] %v433
                %v435 = vld [vmem:[%s321 + $0x1a0] sm:$0xf]
                %436 = vst [vmem:[%s322 + $0xe0] sm:$0xf] %v435
                %v437 = vld [vmem:[%s321 + $0x1a4] sm:$0xf]
                %438 = vst [vmem:[%s322 + $0xe4] sm:$0xf] %v437
                %v439 = vld [vmem:[%s321 + $0x1a8] sm:$0xf]
                %440 = vst [vmem:[%s322 + $0xe8] sm:$0xf] %v439
                %v441 = vld [vmem:[%s321 + $0x1ac] sm:$0xf]
                %442 = vst [vmem:[%s322 + $0xec] sm:$0xf] %v441
                %v443 = vld [vmem:[%s321 + $0x1b0] sm:$0xf]
                %444 = vst [vmem:[%s322 + $0xf0] sm:$0xf] %v443
                %v445 = vld [vmem:[%s321 + $0x1b4] sm:$0xf]
                %446 = vst [vmem:[%s322 + $0xf4] sm:$0xf] %v445
                %v447 = vld [vmem:[%s321 + $0x1b8] sm:$0xf]
                %448 = vst [vmem:[%s322 + $0xf8] sm:$0xf] %v447
                %v449 = vld [vmem:[%s321 + $0x1bc] sm:$0xf]
                %450 = vst [vmem:[%s322 + $0xfc] sm:$0xf] %v449
                %v451 = vld [vmem:[%s321 + $0x200] sm:$0xf]
                %452 = vst [vmem:[%s322 + $0x100] sm:$0xf] %v451
                %v453 = vld [vmem:[%s321 + $0x204] sm:$0xf]
                %454 = vst [vmem:[%s322 + $0x104] sm:$0xf] %v453
                %v455 = vld [vmem:[%s321 + $0x208] sm:$0xf]
                %456 = vst [vmem:[%s322 + $0x108] sm:$0xf] %v455
                %v457 = vld [vmem:[%s321 + $0x20c] sm:$0xf]
                %458 = vst [vmem:[%s322 + $0x10c] sm:$0xf] %v457
                %v459 = vld [vmem:[%s321 + $0x210] sm:$0xf]
                %460 = vst [vmem:[%s322 + $0x110] sm:$0xf] %v459
                %v461 = vld [vmem:[%s321 + $0x214] sm:$0xf]
                %462 = vst [vmem:[%s322 + $0x114] sm:$0xf] %v461
                %v463 = vld [vmem:[%s321 + $0x218] sm:$0xf]
                %464 = vst [vmem:[%s322 + $0x118] sm:$0xf] %v463
                %v465 = vld [vmem:[%s321 + $0x21c] sm:$0xf]
                %466 = vst [vmem:[%s322 + $0x11c] sm:$0xf] %v465
                %v467 = vld [vmem:[%s321 + $0x220] sm:$0xf]
                %468 = vst [vmem:[%s322 + $0x120] sm:$0xf] %v467
                %v469 = vld [vmem:[%s321 + $0x224] sm:$0xf]
                %470 = vst [vmem:[%s322 + $0x124] sm:$0xf] %v469
                %v471 = vld [vmem:[%s321 + $0x228] sm:$0xf]
                %472 = vst [vmem:[%s322 + $0x128] sm:$0xf] %v471
                %v473 = vld [vmem:[%s321 + $0x22c] sm:$0xf]
                %474 = vst [vmem:[%s322 + $0x12c] sm:$0xf] %v473
                %v475 = vld [vmem:[%s321 + $0x230] sm:$0xf]
                %476 = vst [vmem:[%s322 + $0x130] sm:$0xf] %v475
                %v477 = vld [vmem:[%s321 + $0x234] sm:$0xf]
                %478 = vst [vmem:[%s322 + $0x134] sm:$0xf] %v477
                %v479 = vld [vmem:[%s321 + $0x238] sm:$0xf]
                %480 = vst [vmem:[%s322 + $0x138] sm:$0xf] %v479
                %v481 = vld [vmem:[%s321 + $0x23c] sm:$0xf]
                %482 = vst [vmem:[%s322 + $0x13c] sm:$0xf] %v481
                %v483 = vld [vmem:[%s321 + $0x280] sm:$0xf]
                %484 = vst [vmem:[%s322 + $0x140] sm:$0xf] %v483
                %v485 = vld [vmem:[%s321 + $0x284] sm:$0xf]
                %486 = vst [vmem:[%s322 + $0x144] sm:$0xf] %v485
                %v487 = vld [vmem:[%s321 + $0x288] sm:$0xf]
                %488 = vst [vmem:[%s322 + $0x148] sm:$0xf] %v487
                %v489 = vld [vmem:[%s321 + $0x28c] sm:$0xf]
                %490 = vst [vmem:[%s322 + $0x14c] sm:$0xf] %v489
                %v491 = vld [vmem:[%s321 + $0x290] sm:$0xf]
                %492 = vst [vmem:[%s322 + $0x150] sm:$0xf] %v491
                %v493 = vld [vmem:[%s321 + $0x294] sm:$0xf]
                %494 = vst [vmem:[%s322 + $0x154] sm:$0xf] %v493
                %v495 = vld [vmem:[%s321 + $0x298] sm:$0xf]
                %496 = vst [vmem:[%s322 + $0x158] sm:$0xf] %v495
                %v497 = vld [vmem:[%s321 + $0x29c] sm:$0xf]
                %498 = vst [vmem:[%s322 + $0x15c] sm:$0xf] %v497
                %v499 = vld [vmem:[%s321 + $0x2a0] sm:$0xf]
                %500 = vst [vmem:[%s322 + $0x160] sm:$0xf] %v499
                %v501 = vld [vmem:[%s321 + $0x2a4] sm:$0xf]
                %502 = vst [vmem:[%s322 + $0x164] sm:$0xf] %v501
                %v503 = vld [vmem:[%s321 + $0x2a8] sm:$0xf]
                %504 = vst [vmem:[%s322 + $0x168] sm:$0xf] %v503
                %v505 = vld [vmem:[%s321 + $0x2ac] sm:$0xf]
                %506 = vst [vmem:[%s322 + $0x16c] sm:$0xf] %v505
                %v507 = vld [vmem:[%s321 + $0x2b0] sm:$0xf]
                %508 = vst [vmem:[%s322 + $0x170] sm:$0xf] %v507
                %v509 = vld [vmem:[%s321 + $0x2b4] sm:$0xf]
                %510 = vst [vmem:[%s322 + $0x174] sm:$0xf] %v509
                %v511 = vld [vmem:[%s321 + $0x2b8] sm:$0xf]
                %512 = vst [vmem:[%s322 + $0x178] sm:$0xf] %v511
                %v513 = vld [vmem:[%s321 + $0x2bc] sm:$0xf]
                %514 = vst [vmem:[%s322 + $0x17c] sm:$0xf] %v513
                %v515 = vld [vmem:[%s321 + $0x300] sm:$0xf]
                %516 = vst [vmem:[%s322 + $0x180] sm:$0xf] %v515
                %v517 = vld [vmem:[%s321 + $0x304] sm:$0xf]
                %518 = vst [vmem:[%s322 + $0x184] sm:$0xf] %v517
                %v519 = vld [vmem:[%s321 + $0x308] sm:$0xf]
                %520 = vst [vmem:[%s322 + $0x188] sm:$0xf] %v519
                %v521 = vld [vmem:[%s321 + $0x30c] sm:$0xf]
                %522 = vst [vmem:[%s322 + $0x18c] sm:$0xf] %v521
                %v523 = vld [vmem:[%s321 + $0x310] sm:$0xf]
                %524 = vst [vmem:[%s322 + $0x190] sm:$0xf] %v523
                %v525 = vld [vmem:[%s321 + $0x314] sm:$0xf]
                %526 = vst [vmem:[%s322 + $0x194] sm:$0xf] %v525
                %v527 = vld [vmem:[%s321 + $0x318] sm:$0xf]
                %528 = vst [vmem:[%s322 + $0x198] sm:$0xf] %v527
                %v529 = vld [vmem:[%s321 + $0x31c] sm:$0xf]
                %530 = vst [vmem:[%s322 + $0x19c] sm:$0xf] %v529
                %v531 = vld [vmem:[%s321 + $0x320] sm:$0xf]
                %532 = vst [vmem:[%s322 + $0x1a0] sm:$0xf] %v531
                %v533 = vld [vmem:[%s321 + $0x324] sm:$0xf]
                %534 = vst [vmem:[%s322 + $0x1a4] sm:$0xf] %v533
                %v535 = vld [vmem:[%s321 + $0x328] sm:$0xf]
                %536 = vst [vmem:[%s322 + $0x1a8] sm:$0xf] %v535
                %v537 = vld [vmem:[%s321 + $0x32c] sm:$0xf]
                %538 = vst [vmem:[%s322 + $0x1ac] sm:$0xf] %v537
                %v539 = vld [vmem:[%s321 + $0x330] sm:$0xf]
                %540 = vst [vmem:[%s322 + $0x1b0] sm:$0xf] %v539
                %v541 = vld [vmem:[%s321 + $0x334] sm:$0xf]
                %542 = vst [vmem:[%s322 + $0x1b4] sm:$0xf] %v541
                %v543 = vld [vmem:[%s321 + $0x338] sm:$0xf]
                %544 = vst [vmem:[%s322 + $0x1b8] sm:$0xf] %v543
                %v545 = vld [vmem:[%s321 + $0x33c] sm:$0xf]
                %546 = vst [vmem:[%s322 + $0x1bc] sm:$0xf] %v545
                %v547 = vld [vmem:[%s321 + $0x380] sm:$0xf]
                %548 = vst [vmem:[%s322 + $0x1c0] sm:$0xf] %v547
                %v549 = vld [vmem:[%s321 + $0x384] sm:$0xf]
                %550 = vst [vmem:[%s322 + $0x1c4] sm:$0xf] %v549
                %v551 = vld [vmem:[%s321 + $0x388] sm:$0xf]
                %552 = vst [vmem:[%s322 + $0x1c8] sm:$0xf] %v551
                %v553 = vld [vmem:[%s321 + $0x38c] sm:$0xf]
                %554 = vst [vmem:[%s322 + $0x1cc] sm:$0xf] %v553
                %v555 = vld [vmem:[%s321 + $0x390] sm:$0xf]
                %556 = vst [vmem:[%s322 + $0x1d0] sm:$0xf] %v555
                %v557 = vld [vmem:[%s321 + $0x394] sm:$0xf]
                %558 = vst [vmem:[%s322 + $0x1d4] sm:$0xf] %v557
                %v559 = vld [vmem:[%s321 + $0x398] sm:$0xf]
                %560 = vst [vmem:[%s322 + $0x1d8] sm:$0xf] %v559
                %v561 = vld [vmem:[%s321 + $0x39c] sm:$0xf]
                %562 = vst [vmem:[%s322 + $0x1dc] sm:$0xf] %v561
                %v563 = vld [vmem:[%s321 + $0x3a0] sm:$0xf]
                %564 = vst [vmem:[%s322 + $0x1e0] sm:$0xf] %v563
                %v565 = vld [vmem:[%s321 + $0x3a4] sm:$0xf]
                %566 = vst [vmem:[%s322 + $0x1e4] sm:$0xf] %v565
                %v567 = vld [vmem:[%s321 + $0x3a8] sm:$0xf]
                %568 = vst [vmem:[%s322 + $0x1e8] sm:$0xf] %v567
                %v569 = vld [vmem:[%s321 + $0x3ac] sm:$0xf]
                %570 = vst [vmem:[%s322 + $0x1ec] sm:$0xf] %v569
                %v571 = vld [vmem:[%s321 + $0x3b0] sm:$0xf]
                %572 = vst [vmem:[%s322 + $0x1f0] sm:$0xf] %v571
                %v573 = vld [vmem:[%s321 + $0x3b4] sm:$0xf]
                %574 = vst [vmem:[%s322 + $0x1f4] sm:$0xf] %v573
                %v575 = vld [vmem:[%s321 + $0x3b8] sm:$0xf]
                %576 = vst [vmem:[%s322 + $0x1f8] sm:$0xf] %v575
                %v577 = vld [vmem:[%s321 + $0x3bc] sm:$0xf]
                %578 = vst [vmem:[%s322 + $0x1fc] sm:$0xf] %v577
              $region69: #{tpu_custom_call.1} parent=63 // loop_footer
                %s320 = sadd.s32 1, %s316
              $region70: #{tpu_custom_call.1} parent=63 // loop_footer_branch
                %315 = sbr.rel target = $region66
              $region71: #{tpu_custom_call.1} parent=63 // loop_exit
                _
            $region64: #{tpu_custom_call.1} parent=55 // pred_fallthru
              _
          $region56: #{tpu_custom_call.1} parent=51 // pred_fallthru
            _
          %854 = vnop
        $region52: #{tpu_custom_call.1} parent=47 // pred_fallthru
          _
      $region48: #{tpu_custom_call.1} parent=5 // pred_fallthru
        _
      %p855 = scmp.le.s32.totalorder 1, %s18
      %p856 = scmp.lt.s32.totalorder %s18, 5
      %p857 = pnand %p855, %p856
      %p858 = pneg %p857
      // Predicated region
      $region90: #{tpu_custom_call.1} parent=5 // pred_check
        _
      $region91: #{tpu_custom_call.1} parent=5 // pred_check_branch
        %860 = sbr.rel (%p857) target = $region93
      $region92: #{tpu_custom_call.1} parent=5 // pred_region
        %s861 = ssub.s32 %s18, 1
        %s862 = sand.u32 %s45, 1
        %s863 = sand.u32 %s45, 1
        %s864 = smul.addr %s863, 512
        %s865 = scalar_lea.vmem [#allocation3], %s864
        // Predicated region
        $region94: #{tpu_custom_call.1} parent=92 // pred_check
          %p866 = pneg %p58
        $region95: #{tpu_custom_call.1} parent=92 // pred_check_branch
          %868 = sbr.rel (%p866) target = $region97
        $region96: #{tpu_custom_call.1} parent=92 // pred_region
          _
        $region97: #{tpu_custom_call.1} parent=92 // pred_fallthru
          _
        %s869 = sand.u32 %s45, 1
        %s870 = sand.u32 %s45, 1
        %s871 = smul.addr %s870, 512
        %s872 = scalar_lea.vmem [#allocation3], %s871
        %p873 = pneg %p58
        %p874 = pneg %p55
        %p875 = pneg %p79
        %p876 = pneg %p76
        %p877 = pneg %p100
        %p878 = pneg %p97
        %p879 = pneg %p121
        %p880 = pneg %p118
        %p881 = pneg %p142
        %p882 = pneg %p139
        %p883 = pneg %p163
        %p884 = pneg %p160
        %p885 = pneg %p184
        %p886 = pneg %p181
        %p887 = pneg %p205
        %p888 = pneg %p202
        %p889 = pneg %p226
        %p890 = pneg %p223
        %p891 = pneg %p252
        %p892 = pneg %p249
        %s893 = sand.u32 %s239, 1
        %s894 = scalar_lea.sflag [#allocation5], %s893
        %s895 = sand.u32 %s239, 1
        %s896 = smul.addr %s895, 8
        %s897 = scalar_lea.vmem [#allocation4], %s896
        %s898 = smul.u32 4, %s27
        %s899 = smul.u32 16, %s28
        %p901 = scmp.eq.s32.totalorder %s28, 0
        // Predicated region
        $region98: #{tpu_custom_call.1} parent=92 // pred_check
          %p902 = pneg %p901
        $region99: #{tpu_custom_call.1} parent=92 // pred_check_branch
          %904 = sbr.rel (%p902) target = $region101
        $region100: #{tpu_custom_call.1} parent=92 // pred_region
          %905 = vst [vmem:[#allocation2] sm:$0xff] 0.0
        $region101: #{tpu_custom_call.1} parent=92 // pred_fallthru
          _
        %v906 = vld [vmem:[%s865] sm:$0xf]
        %v907 = vld [vmem:[%s865 + $0x4] sm:$0xf]
        %v908 = vld [vmem:[%s865 + $0x8] sm:$0xf]
        %v909 = vld [vmem:[%s865 + $0xc] sm:$0xf]
        %v910 = vld [vmem:[%s865 + $0x10] sm:$0xf]
        %v911 = vld [vmem:[%s865 + $0x14] sm:$0xf]
        %v912 = vld [vmem:[%s865 + $0x18] sm:$0xf]
        %v913 = vld [vmem:[%s865 + $0x1c] sm:$0xf]
        %v914 = vld [vmem:[%s865 + $0x20] sm:$0xf]
        %v915 = vld [vmem:[%s865 + $0x24] sm:$0xf]
        %v916 = vld [vmem:[%s865 + $0x28] sm:$0xf]
        %v917 = vld [vmem:[%s865 + $0x2c] sm:$0xf]
        %v918 = vld [vmem:[%s865 + $0x30] sm:$0xf]
        %v919 = vld [vmem:[%s865 + $0x34] sm:$0xf]
        %v920 = vld [vmem:[%s865 + $0x38] sm:$0xf]
        %v921 = vld [vmem:[%s865 + $0x3c] sm:$0xf]
        %v922 = vld [vmem:[%s865 + $0x40] sm:$0xf]
        %v923 = vld [vmem:[%s865 + $0x44] sm:$0xf]
        %v924 = vld [vmem:[%s865 + $0x48] sm:$0xf]
        %v925 = vld [vmem:[%s865 + $0x4c] sm:$0xf]
        %v926 = vld [vmem:[%s865 + $0x50] sm:$0xf]
        %v927 = vld [vmem:[%s865 + $0x54] sm:$0xf]
        %v928 = vld [vmem:[%s865 + $0x58] sm:$0xf]
        %v929 = vld [vmem:[%s865 + $0x5c] sm:$0xf]
        %v930 = vld [vmem:[%s865 + $0x60] sm:$0xf]
        %v931 = vld [vmem:[%s865 + $0x64] sm:$0xf]
        %v932 = vld [vmem:[%s865 + $0x68] sm:$0xf]
        %v933 = vld [vmem:[%s865 + $0x6c] sm:$0xf]
        %v934 = vld [vmem:[%s865 + $0x70] sm:$0xf]
        %v935 = vld [vmem:[%s865 + $0x74] sm:$0xf]
        %v936 = vld [vmem:[%s865 + $0x78] sm:$0xf]
        %v937 = vld [vmem:[%s865 + $0x7c] sm:$0xf]
        %v938 = vld [vmem:[%s865 + $0x80] sm:$0xf]
        %v939 = vld [vmem:[%s865 + $0x84] sm:$0xf]
        %v940 = vld [vmem:[%s865 + $0x88] sm:$0xf]
        %v941 = vld [vmem:[%s865 + $0x8c] sm:$0xf]
        %v942 = vld [vmem:[%s865 + $0x90] sm:$0xf]
        %v943 = vld [vmem:[%s865 + $0x94] sm:$0xf]
        %v944 = vld [vmem:[%s865 + $0x98] sm:$0xf]
        %v945 = vld [vmem:[%s865 + $0x9c] sm:$0xf]
        %v946 = vld [vmem:[%s865 + $0xa0] sm:$0xf]
        %v947 = vld [vmem:[%s865 + $0xa4] sm:$0xf]
        %v948 = vld [vmem:[%s865 + $0xa8] sm:$0xf]
        %v949 = vld [vmem:[%s865 + $0xac] sm:$0xf]
        %v950 = vld [vmem:[%s865 + $0xb0] sm:$0xf]
        %v951 = vld [vmem:[%s865 + $0xb4] sm:$0xf]
        %v952 = vld [vmem:[%s865 + $0xb8] sm:$0xf]
        %v953 = vld [vmem:[%s865 + $0xbc] sm:$0xf]
        %v954 = vld [vmem:[%s865 + $0xc0] sm:$0xf]
        %v955 = vld [vmem:[%s865 + $0xc4] sm:$0xf]
        %v956 = vld [vmem:[%s865 + $0xc8] sm:$0xf]
        %v957 = vld [vmem:[%s865 + $0xcc] sm:$0xf]
        %v958 = vld [vmem:[%s865 + $0xd0] sm:$0xf]
        %v959 = vld [vmem:[%s865 + $0xd4] sm:$0xf]
        %v960 = vld [vmem:[%s865 + $0xd8] sm:$0xf]
        %v961 = vld [vmem:[%s865 + $0xdc] sm:$0xf]
        %v962 = vld [vmem:[%s865 + $0xe0] sm:$0xf]
        %v963 = vld [vmem:[%s865 + $0xe4] sm:$0xf]
        %v964 = vld [vmem:[%s865 + $0xe8] sm:$0xf]
        %v965 = vld [vmem:[%s865 + $0xec] sm:$0xf]
        %v966 = vld [vmem:[%s865 + $0xf0] sm:$0xf]
        %v967 = vld [vmem:[%s865 + $0xf4] sm:$0xf]
        %v968 = vld [vmem:[%s865 + $0xf8] sm:$0xf]
        %v969 = vld [vmem:[%s865 + $0xfc] sm:$0xf]
        %v970 = vld [vmem:[%s865 + $0x100] sm:$0xf]
        %v971 = vld [vmem:[%s865 + $0x104] sm:$0xf]
        %v972 = vld [vmem:[%s865 + $0x108] sm:$0xf]
        %v973 = vld [vmem:[%s865 + $0x10c] sm:$0xf]
        %v974 = vld [vmem:[%s865 + $0x110] sm:$0xf]
        %v975 = vld [vmem:[%s865 + $0x114] sm:$0xf]
        %v976 = vld [vmem:[%s865 + $0x118] sm:$0xf]
        %v977 = vld [vmem:[%s865 + $0x11c] sm:$0xf]
        %v978 = vld [vmem:[%s865 + $0x120] sm:$0xf]
        %v979 = vld [vmem:[%s865 + $0x124] sm:$0xf]
        %v980 = vld [vmem:[%s865 + $0x128] sm:$0xf]
        %v981 = vld [vmem:[%s865 + $0x12c] sm:$0xf]
        %v982 = vld [vmem:[%s865 + $0x130] sm:$0xf]
        %v983 = vld [vmem:[%s865 + $0x134] sm:$0xf]
        %v984 = vld [vmem:[%s865 + $0x138] sm:$0xf]
        %v985 = vld [vmem:[%s865 + $0x13c] sm:$0xf]
        %v986 = vld [vmem:[%s865 + $0x140] sm:$0xf]
        %v987 = vld [vmem:[%s865 + $0x144] sm:$0xf]
        %v988 = vld [vmem:[%s865 + $0x148] sm:$0xf]
        %v989 = vld [vmem:[%s865 + $0x14c] sm:$0xf]
        %v990 = vld [vmem:[%s865 + $0x150] sm:$0xf]
        %v991 = vld [vmem:[%s865 + $0x154] sm:$0xf]
        %v992 = vld [vmem:[%s865 + $0x158] sm:$0xf]
        %v993 = vld [vmem:[%s865 + $0x15c] sm:$0xf]
        %v994 = vld [vmem:[%s865 + $0x160] sm:$0xf]
        %v995 = vld [vmem:[%s865 + $0x164] sm:$0xf]
        %v996 = vld [vmem:[%s865 + $0x168] sm:$0xf]
        %v997 = vld [vmem:[%s865 + $0x16c] sm:$0xf]
        %v998 = vld [vmem:[%s865 + $0x170] sm:$0xf]
        %v999 = vld [vmem:[%s865 + $0x174] sm:$0xf]
        %v1000 = vld [vmem:[%s865 + $0x178] sm:$0xf]
        %v1001 = vld [vmem:[%s865 + $0x17c] sm:$0xf]
        %v1002 = vld [vmem:[%s865 + $0x180] sm:$0xf]
        %v1003 = vld [vmem:[%s865 + $0x184] sm:$0xf]
        %v1004 = vld [vmem:[%s865 + $0x188] sm:$0xf]
        %v1005 = vld [vmem:[%s865 + $0x18c] sm:$0xf]
        %v1006 = vld [vmem:[%s865 + $0x190] sm:$0xf]
        %v1007 = vld [vmem:[%s865 + $0x194] sm:$0xf]
        %v1008 = vld [vmem:[%s865 + $0x198] sm:$0xf]
        %v1009 = vld [vmem:[%s865 + $0x19c] sm:$0xf]
        %v1010 = vld [vmem:[%s865 + $0x1a0] sm:$0xf]
        %v1011 = vld [vmem:[%s865 + $0x1a4] sm:$0xf]
        %v1012 = vld [vmem:[%s865 + $0x1a8] sm:$0xf]
        %v1013 = vld [vmem:[%s865 + $0x1ac] sm:$0xf]
        %v1014 = vld [vmem:[%s865 + $0x1b0] sm:$0xf]
        %v1015 = vld [vmem:[%s865 + $0x1b4] sm:$0xf]
        %v1016 = vld [vmem:[%s865 + $0x1b8] sm:$0xf]
        %v1017 = vld [vmem:[%s865 + $0x1bc] sm:$0xf]
        %v1018 = vld [vmem:[%s865 + $0x1c0] sm:$0xf]
        %v1019 = vld [vmem:[%s865 + $0x1c4] sm:$0xf]
        %v1020 = vld [vmem:[%s865 + $0x1c8] sm:$0xf]
        %v1021 = vld [vmem:[%s865 + $0x1cc] sm:$0xf]
        %v1022 = vld [vmem:[%s865 + $0x1d0] sm:$0xf]
        %v1023 = vld [vmem:[%s865 + $0x1d4] sm:$0xf]
        %v1024 = vld [vmem:[%s865 + $0x1d8] sm:$0xf]
        %v1025 = vld [vmem:[%s865 + $0x1dc] sm:$0xf]
        %v1026 = vld [vmem:[%s865 + $0x1e0] sm:$0xf]
        %v1027 = vld [vmem:[%s865 + $0x1e4] sm:$0xf]
        %v1028 = vld [vmem:[%s865 + $0x1e8] sm:$0xf]
        %v1029 = vld [vmem:[%s865 + $0x1ec] sm:$0xf]
        %v1030 = vld [vmem:[%s865 + $0x1f0] sm:$0xf]
        %v1031 = vld [vmem:[%s865 + $0x1f4] sm:$0xf]
        %v1032 = vld [vmem:[%s865 + $0x1f8] sm:$0xf]
        %v1033 = vld [vmem:[%s865 + $0x1fc] sm:$0xf]
        %v1034 = vld [vmem:[%s1] sm:$0xf]
        %v1035 = vld [vmem:[%s1 + $0x4] sm:$0xf]
        %v1036 = vld [vmem:[%s1 + $0x8] sm:$0xf]
        %v1037 = vld [vmem:[%s1 + $0xc] sm:$0xf]
        %v1038 = vld [vmem:[%s2] sm:$0x1]
        %v1040 = vlaneseq
        %v1041 = vshrl.u32 %v1040, 7
        %v1042 = vsub.s32 0, %v1041
        %v1043 = vrot.slane %v1038, %v1042
        %v1173 = vunpack.c.l.b16 %v906
        %v1174 = vunpack.c.l.b16 %v907
        %v1175 = vunpack.c.l.b16 %v908
        %v1176 = vunpack.c.l.b16 %v909
        %v1177 = vunpack.c.l.b16 %v910
        %v1178 = vunpack.c.l.b16 %v911
        %v1179 = vunpack.c.l.b16 %v912
        %v1180 = vunpack.c.l.b16 %v913
        %v1181 = vunpack.c.l.b16 %v914
        %v1182 = vunpack.c.l.b16 %v915
        %v1183 = vunpack.c.l.b16 %v916
        %v1184 = vunpack.c.l.b16 %v917
        %v1185 = vunpack.c.l.b16 %v918
        %v1186 = vunpack.c.l.b16 %v919
        %v1187 = vunpack.c.l.b16 %v920
        %v1188 = vunpack.c.l.b16 %v921
        %v1189 = vunpack.c.l.b16 %v922
        %v1190 = vunpack.c.l.b16 %v923
        %v1191 = vunpack.c.l.b16 %v924
        %v1192 = vunpack.c.l.b16 %v925
        %v1193 = vunpack.c.l.b16 %v926
        %v1194 = vunpack.c.l.b16 %v927
        %v1195 = vunpack.c.l.b16 %v928
        %v1196 = vunpack.c.l.b16 %v929
        %v1197 = vunpack.c.l.b16 %v930
        %v1198 = vunpack.c.l.b16 %v931
        %v1199 = vunpack.c.l.b16 %v932
        %v1200 = vunpack.c.l.b16 %v933
        %v1201 = vunpack.c.l.b16 %v934
        %v1202 = vunpack.c.l.b16 %v935
        %v1203 = vunpack.c.l.b16 %v936
        %v1204 = vunpack.c.l.b16 %v937
        %v1205 = vunpack.c.l.b16 %v938
        %v1206 = vunpack.c.l.b16 %v939
        %v1207 = vunpack.c.l.b16 %v940
        %v1208 = vunpack.c.l.b16 %v941
        %v1209 = vunpack.c.l.b16 %v942
        %v1210 = vunpack.c.l.b16 %v943
        %v1211 = vunpack.c.l.b16 %v944
        %v1212 = vunpack.c.l.b16 %v945
        %v1213 = vunpack.c.l.b16 %v946
        %v1214 = vunpack.c.l.b16 %v947
        %v1215 = vunpack.c.l.b16 %v948
        %v1216 = vunpack.c.l.b16 %v949
        %v1217 = vunpack.c.l.b16 %v950
        %v1218 = vunpack.c.l.b16 %v951
        %v1219 = vunpack.c.l.b16 %v952
        %v1220 = vunpack.c.l.b16 %v953
        %v1221 = vunpack.c.l.b16 %v954
        %v1222 = vunpack.c.l.b16 %v955
        %v1223 = vunpack.c.l.b16 %v956
        %v1224 = vunpack.c.l.b16 %v957
        %v1225 = vunpack.c.l.b16 %v958
        %v1226 = vunpack.c.l.b16 %v959
        %v1227 = vunpack.c.l.b16 %v960
        %v1228 = vunpack.c.l.b16 %v961
        %v1229 = vunpack.c.l.b16 %v962
        %v1230 = vunpack.c.l.b16 %v963
        %v1231 = vunpack.c.l.b16 %v964
        %v1232 = vunpack.c.l.b16 %v965
        %v1233 = vunpack.c.l.b16 %v966
        %v1234 = vunpack.c.l.b16 %v967
        %v1235 = vunpack.c.l.b16 %v968
        %v1236 = vunpack.c.l.b16 %v969
        %v1237 = vunpack.c.l.b16 %v970
        %v1238 = vunpack.c.l.b16 %v971
        %v1239 = vunpack.c.l.b16 %v972
        %v1240 = vunpack.c.l.b16 %v973
        %v1241 = vunpack.c.l.b16 %v974
        %v1242 = vunpack.c.l.b16 %v975
        %v1243 = vunpack.c.l.b16 %v976
        %v1244 = vunpack.c.l.b16 %v977
        %v1245 = vunpack.c.l.b16 %v978
        %v1246 = vunpack.c.l.b16 %v979
        %v1247 = vunpack.c.l.b16 %v980
        %v1248 = vunpack.c.l.b16 %v981
        %v1249 = vunpack.c.l.b16 %v982
        %v1250 = vunpack.c.l.b16 %v983
        %v1251 = vunpack.c.l.b16 %v984
        %v1252 = vunpack.c.l.b16 %v985
        %v1253 = vunpack.c.l.b16 %v986
        %v1254 = vunpack.c.l.b16 %v987
        %v1255 = vunpack.c.l.b16 %v988
        %v1256 = vunpack.c.l.b16 %v989
        %v1257 = vunpack.c.l.b16 %v990
        %v1258 = vunpack.c.l.b16 %v991
        %v1259 = vunpack.c.l.b16 %v992
        %v1260 = vunpack.c.l.b16 %v993
        %v1261 = vunpack.c.l.b16 %v994
        %v1262 = vunpack.c.l.b16 %v995
        %v1263 = vunpack.c.l.b16 %v996
        %v1264 = vunpack.c.l.b16 %v997
        %v1265 = vunpack.c.l.b16 %v998
        %v1266 = vunpack.c.l.b16 %v999
        %v1267 = vunpack.c.l.b16 %v1000
        %v1268 = vunpack.c.l.b16 %v1001
        %v1269 = vunpack.c.l.b16 %v1002
        %v1270 = vunpack.c.l.b16 %v1003
        %v1271 = vunpack.c.l.b16 %v1004
        %v1272 = vunpack.c.l.b16 %v1005
        %v1273 = vunpack.c.l.b16 %v1006
        %v1274 = vunpack.c.l.b16 %v1007
        %v1275 = vunpack.c.l.b16 %v1008
        %v1276 = vunpack.c.l.b16 %v1009
        %v1277 = vunpack.c.l.b16 %v1010
        %v1278 = vunpack.c.l.b16 %v1011
        %v1279 = vunpack.c.l.b16 %v1012
        %v1280 = vunpack.c.l.b16 %v1013
        %v1281 = vunpack.c.l.b16 %v1014
        %v1282 = vunpack.c.l.b16 %v1015
        %v1283 = vunpack.c.l.b16 %v1016
        %v1284 = vunpack.c.l.b16 %v1017
        %v1285 = vunpack.c.l.b16 %v1018
        %v1286 = vunpack.c.l.b16 %v1019
        %v1287 = vunpack.c.l.b16 %v1020
        %v1288 = vunpack.c.l.b16 %v1021
        %v1289 = vunpack.c.l.b16 %v1022
        %v1290 = vunpack.c.l.b16 %v1023
        %v1291 = vunpack.c.l.b16 %v1024
        %v1292 = vunpack.c.l.b16 %v1025
        %v1293 = vunpack.c.l.b16 %v1026
        %v1294 = vunpack.c.l.b16 %v1027
        %v1295 = vunpack.c.l.b16 %v1028
        %v1296 = vunpack.c.l.b16 %v1029
        %v1297 = vunpack.c.l.b16 %v1030
        %v1298 = vunpack.c.l.b16 %v1031
        %v1299 = vunpack.c.l.b16 %v1032
        %v1300 = vunpack.c.l.b16 %v1033
        %v1301 = vpack.c.b16 %v1174, %v1173
        %v1302 = vpack.c.b16 %v1176, %v1175
        %v1303 = vpack.c.b16 %v1178, %v1177
        %v1304 = vpack.c.b16 %v1180, %v1179
        %v1305 = vpack.c.b16 %v1182, %v1181
        %v1306 = vpack.c.b16 %v1184, %v1183
        %v1307 = vpack.c.b16 %v1186, %v1185
        %v1308 = vpack.c.b16 %v1188, %v1187
        %v1309 = vpack.c.b16 %v1190, %v1189
        %v1310 = vpack.c.b16 %v1192, %v1191
        %v1311 = vpack.c.b16 %v1194, %v1193
        %v1312 = vpack.c.b16 %v1196, %v1195
        %v1313 = vpack.c.b16 %v1198, %v1197
        %v1314 = vpack.c.b16 %v1200, %v1199
        %v1315 = vpack.c.b16 %v1202, %v1201
        %v1316 = vpack.c.b16 %v1204, %v1203
        %v1317 = vpack.c.b16 %v1206, %v1205
        %v1318 = vpack.c.b16 %v1208, %v1207
        %v1319 = vpack.c.b16 %v1210, %v1209
        %v1320 = vpack.c.b16 %v1212, %v1211
        %v1321 = vpack.c.b16 %v1214, %v1213
        %v1322 = vpack.c.b16 %v1216, %v1215
        %v1323 = vpack.c.b16 %v1218, %v1217
        %v1324 = vpack.c.b16 %v1220, %v1219
        %v1325 = vpack.c.b16 %v1222, %v1221
        %v1326 = vpack.c.b16 %v1224, %v1223
        %v1327 = vpack.c.b16 %v1226, %v1225
        %v1328 = vpack.c.b16 %v1228, %v1227
        %v1329 = vpack.c.b16 %v1230, %v1229
        %v1330 = vpack.c.b16 %v1232, %v1231
        %v1331 = vpack.c.b16 %v1234, %v1233
        %v1332 = vpack.c.b16 %v1236, %v1235
        %v1333 = vpack.c.b16 %v1238, %v1237
        %v1334 = vpack.c.b16 %v1240, %v1239
        %v1335 = vpack.c.b16 %v1242, %v1241
        %v1336 = vpack.c.b16 %v1244, %v1243
        %v1337 = vpack.c.b16 %v1246, %v1245
        %v1338 = vpack.c.b16 %v1248, %v1247
        %v1339 = vpack.c.b16 %v1250, %v1249
        %v1340 = vpack.c.b16 %v1252, %v1251
        %v1341 = vpack.c.b16 %v1254, %v1253
        %v1342 = vpack.c.b16 %v1256, %v1255
        %v1343 = vpack.c.b16 %v1258, %v1257
        %v1344 = vpack.c.b16 %v1260, %v1259
        %v1345 = vpack.c.b16 %v1262, %v1261
        %v1346 = vpack.c.b16 %v1264, %v1263
        %v1347 = vpack.c.b16 %v1266, %v1265
        %v1348 = vpack.c.b16 %v1268, %v1267
        %v1349 = vpack.c.b16 %v1270, %v1269
        %v1350 = vpack.c.b16 %v1272, %v1271
        %v1351 = vpack.c.b16 %v1274, %v1273
        %v1352 = vpack.c.b16 %v1276, %v1275
        %v1353 = vpack.c.b16 %v1278, %v1277
        %v1354 = vpack.c.b16 %v1280, %v1279
        %v1355 = vpack.c.b16 %v1282, %v1281
        %v1356 = vpack.c.b16 %v1284, %v1283
        %v1357 = vpack.c.b16 %v1286, %v1285
        %v1358 = vpack.c.b16 %v1288, %v1287
        %v1359 = vpack.c.b16 %v1290, %v1289
        %v1360 = vpack.c.b16 %v1292, %v1291
        %v1361 = vpack.c.b16 %v1294, %v1293
        %v1362 = vpack.c.b16 %v1296, %v1295
        %v1363 = vpack.c.b16 %v1298, %v1297
        %v1364 = vpack.c.b16 %v1300, %v1299
        %v1369 = vunpack.c.l.b16 %v1034
        %v1370 = vunpack.c.l.b16 %v1035
        %v1371 = vunpack.c.l.b16 %v1036
        %v1372 = vunpack.c.l.b16 %v1037
        %v1373 = vpack.c.b16 %v1370, %v1369
        %v1374 = vpack.c.b16 %v1372, %v1371
        %vm1377 = vcmask 261120
        %v1379 = vsel %vm1377, %v1301, 0
        %v1382 = vsel %vm1377, %v1302, 0
        %v1385 = vsel %vm1377, %v1303, 0
        %v1388 = vsel %vm1377, %v1304, 0
        %v1391 = vsel %vm1377, %v1305, 0
        %v1394 = vsel %vm1377, %v1306, 0
        %v1397 = vsel %vm1377, %v1307, 0
        %v1400 = vsel %vm1377, %v1308, 0
        %v1403 = vsel %vm1377, %v1309, 0
        %v1406 = vsel %vm1377, %v1310, 0
        %v1409 = vsel %vm1377, %v1311, 0
        %v1412 = vsel %vm1377, %v1312, 0
        %v1415 = vsel %vm1377, %v1313, 0
        %v1418 = vsel %vm1377, %v1314, 0
        %v1421 = vsel %vm1377, %v1315, 0
        %v1424 = vsel %vm1377, %v1316, 0
        %v1427 = vsel %vm1377, %v1317, 0
        %v1430 = vsel %vm1377, %v1318, 0
        %v1433 = vsel %vm1377, %v1319, 0
        %v1436 = vsel %vm1377, %v1320, 0
        %v1439 = vsel %vm1377, %v1321, 0
        %v1442 = vsel %vm1377, %v1322, 0
        %v1445 = vsel %vm1377, %v1323, 0
        %v1448 = vsel %vm1377, %v1324, 0
        %v1451 = vsel %vm1377, %v1325, 0
        %v1454 = vsel %vm1377, %v1326, 0
        %v1457 = vsel %vm1377, %v1327, 0
        %v1460 = vsel %vm1377, %v1328, 0
        %v1463 = vsel %vm1377, %v1329, 0
        %v1466 = vsel %vm1377, %v1330, 0
        %v1469 = vsel %vm1377, %v1331, 0
        %v1472 = vsel %vm1377, %v1332, 0
        %v1475 = vsel %vm1377, %v1333, 0
        %v1478 = vsel %vm1377, %v1334, 0
        %v1481 = vsel %vm1377, %v1335, 0
        %v1484 = vsel %vm1377, %v1336, 0
        %v1487 = vsel %vm1377, %v1337, 0
        %v1490 = vsel %vm1377, %v1338, 0
        %v1493 = vsel %vm1377, %v1339, 0
        %v1496 = vsel %vm1377, %v1340, 0
        %v1499 = vsel %vm1377, %v1341, 0
        %v1502 = vsel %vm1377, %v1342, 0
        %v1505 = vsel %vm1377, %v1343, 0
        %v1508 = vsel %vm1377, %v1344, 0
        %v1511 = vsel %vm1377, %v1345, 0
        %v1514 = vsel %vm1377, %v1346, 0
        %v1517 = vsel %vm1377, %v1347, 0
        %v1520 = vsel %vm1377, %v1348, 0
        %v1523 = vsel %vm1377, %v1349, 0
        %v1526 = vsel %vm1377, %v1350, 0
        %v1529 = vsel %vm1377, %v1351, 0
        %v1532 = vsel %vm1377, %v1352, 0
        %v1535 = vsel %vm1377, %v1353, 0
        %v1538 = vsel %vm1377, %v1354, 0
        %v1541 = vsel %vm1377, %v1355, 0
        %v1544 = vsel %vm1377, %v1356, 0
        %v1547 = vsel %vm1377, %v1357, 0
        %v1550 = vsel %vm1377, %v1358, 0
        %v1553 = vsel %vm1377, %v1359, 0
        %v1556 = vsel %vm1377, %v1360, 0
        %v1559 = vsel %vm1377, %v1361, 0
        %v1562 = vsel %vm1377, %v1362, 0
        %v1565 = vsel %vm1377, %v1363, 0
        %v1568 = vsel %vm1377, %v1364, 0
        %1570 = vmatprep.subr.bf16.mxu0 0
        %1571 = vmatpush1.bf16.msra.mxu0 %v1373
        %1572 = vmatprep.subr.bf16.mxu0 0
        %1573 = vmatpush1.bf16.msra.mxu0 %v1374
        %1574 = vmatprep.subr.bf16.mxu0 0
        %1575 = vmatpush1.bf16.msra.mxu0 0
        %1576 = vmatprep.subr.bf16.mxu0 0
        %1577 = vmatpush1.bf16.msra.mxu0 0
        %1578 = vmatprep.subr.bf16.mxu0 0
        %1579 = vmatpush1.bf16.msra.mxu0 0
        %1580 = vmatprep.subr.bf16.mxu0 0
        %1581 = vmatpush1.bf16.msra.mxu0 0
        %1582 = vmatprep.subr.bf16.mxu0 0
        %1583 = vmatpush1.bf16.msra.mxu0 0
        %1584 = vmatprep.subr.bf16.mxu0 0
        %1585 = vmatpush1.bf16.msra.mxu0 0
        %1586 = vmatprep.subr.bf16.mxu0 0
        %1587 = vmatpush1.bf16.msra.mxu0 0
        %1588 = vmatprep.subr.bf16.mxu0 0
        %1589 = vmatpush1.bf16.msra.mxu0 0
        %1590 = vmatprep.subr.bf16.mxu0 0
        %1591 = vmatpush1.bf16.msra.mxu0 0
        %1592 = vmatprep.subr.bf16.mxu0 0
        %1593 = vmatpush1.bf16.msra.mxu0 0
        %1594 = vmatprep.subr.bf16.mxu0 0
        %1595 = vmatpush1.bf16.msra.mxu0 0
        %1596 = vmatprep.subr.bf16.mxu0 0
        %1597 = vmatpush1.bf16.msra.mxu0 0
        %1598 = vmatprep.subr.bf16.mxu0 0
        %1599 = vmatpush1.bf16.msra.mxu0 0
        %1600 = vmatprep.subr.bf16.mxu0 0
        %1601 = vmatpush1.bf16.msra.mxu0 0
        %1602 = vmatprep.mubr.bf16.mxu0 0
        %1603 = vmatmul.mubr.bf16.gmra.mrb[0].mxu0 %v1379
        %v1604 = vpop.f32.mrb[0].mxu0
        %v1605 = vadd.f32 %v1043, %v1604
        %v1606 = vpop.f32.mrb[0].mxu0
        %v1607 = vpop.f32.mrb[0].mxu0
        %v1608 = vadd.f32 %v1043, %v1607
        %v1609 = vpop.f32.mrb[0].mxu0
        %1610 = vmatprep.mubr.bf16.mxu0 0
        %1611 = vmatmul.mubr.bf16.gmra.mrb[0].mxu0 %v1382
        %v1612 = vpop.f32.mrb[0].mxu0
        %v1613 = vadd.f32 %v1043, %v1612
        %v1614 = vpop.f32.mrb[0].mxu0
        %v1615 = vpop.f32.mrb[0].mxu0
        %v1616 = vadd.f32 %v1043, %v1615
        %v1617 = vpop.f32.mrb[0].mxu0
        %1618 = vmatprep.mubr.bf16.mxu0 0
        %1619 = vmatmul.mubr.bf16.gmra.mrb[0].mxu0 %v1385
        %v1620 = vpop.f32.mrb[0].mxu0
        %v1621 = vadd.f32 %v1043, %v1620
        %v1622 = vpop.f32.mrb[0].mxu0
        %v1623 = vpop.f32.mrb[0].mxu0
        %v1624 = vadd.f32 %v1043, %v1623
        %v1625 = vpop.f32.mrb[0].mxu0
        %1626 = vmatprep.mubr.bf16.mxu0 0
        %1627 = vmatmul.mubr.bf16.gmra.mrb[0].mxu0 %v1388
        %v1628 = vpop.f32.mrb[0].mxu0
        %v1629 = vadd.f32 %v1043, %v1628
        %v1630 = vpop.f32.mrb[0].mxu0
        %v1631 = vpop.f32.mrb[0].mxu0
        %v1632 = vadd.f32 %v1043, %v1631
        %v1633 = vpop.f32.mrb[0].mxu0
        %1634 = vmatprep.mubr.bf16.mxu0 0
        %1635 = vmatmul.mubr.bf16.gmra.mrb[0].mxu0 %v1391
        %v1636 = vpop.f32.mrb[0].mxu0
        %v1637 = vadd.f32 %v1043, %v1636
        %v1638 = vpop.f32.mrb[0].mxu0
        %v1639 = vpop.f32.mrb[0].mxu0
        %v1640 = vadd.f32 %v1043, %v1639
        %v1641 = vpop.f32.mrb[0].mxu0
        %1642 = vmatprep.mubr.bf16.mxu0 0
        %1643 = vmatmul.mubr.bf16.gmra.mrb[0].mxu0 %v1394
        %v1644 = vpop.f32.mrb[0].mxu0
        %v1645 = vadd.f32 %v1043, %v1644
        %v1646 = vpop.f32.mrb[0].mxu0
        %v1647 = vpop.f32.mrb[0].mxu0
        %v1648 = vadd.f32 %v1043, %v1647
        %v1649 = vpop.f32.mrb[0].mxu0
        %1650 = vmatprep.mubr.bf16.mxu0 0
        %1651 = vmatmul.mubr.bf16.gmra.mrb[0].mxu0 %v1397
        %v1652 = vpop.f32.mrb[0].mxu0
        %v1653 = vadd.f32 %v1043, %v1652
        %v1654 = vpop.f32.mrb[0].mxu0
        %v1655 = vpop.f32.mrb[0].mxu0
        %v1656 = vadd.f32 %v1043, %v1655
        %v1657 = vpop.f32.mrb[0].mxu0
        %1658 = vmatprep.mubr.bf16.mxu0 0
        %1659 = vmatmul.mubr.bf16.gmra.mrb[0].mxu0 %v1400
        %v1660 = vpop.f32.mrb[0].mxu0
        %v1661 = vadd.f32 %v1043, %v1660
        %v1662 = vpop.f32.mrb[0].mxu0
        %v1663 = vpop.f32.mrb[0].mxu0
        %v1664 = vadd.f32 %v1043, %v1663
        %v1665 = vpop.f32.mrb[0].mxu0
        %1666 = vmatprep.mubr.bf16.mxu0 0
        %1667 = vmatmul.mubr.bf16.gmra.mrb[0].mxu0 %v1403
        %v1668 = vpop.f32.mrb[0].mxu0
        %v1669 = vadd.f32 %v1043, %v1668
        %v1670 = vpop.f32.mrb[0].mxu0
        %v1671 = vpop.f32.mrb[0].mxu0
        %v1672 = vadd.f32 %v1043, %v1671
        %v1673 = vpop.f32.mrb[0].mxu0
        %1674 = vmatprep.mubr.bf16.mxu0 0
        %1675 = vmatmul.mubr.bf16.gmra.mrb[0].mxu0 %v1406
        %v1676 = vpop.f32.mrb[0].mxu0
        %v1677 = vadd.f32 %v1043, %v1676
        %v1678 = vpop.f32.mrb[0].mxu0
        %v1679 = vpop.f32.mrb[0].mxu0
        %v1680 = vadd.f32 %v1043, %v1679
        %v1681 = vpop.f32.mrb[0].mxu0
        %1682 = vmatprep.mubr.bf16.mxu0 0
        %1683 = vmatmul.mubr.bf16.gmra.mrb[0].mxu0 %v1409
        %v1684 = vpop.f32.mrb[0].mxu0
        %v1685 = vadd.f32 %v1043, %v1684
        %v1686 = vpop.f32.mrb[0].mxu0
        %v1687 = vpop.f32.mrb[0].mxu0
        %v1688 = vadd.f32 %v1043, %v1687
        %v1689 = vpop.f32.mrb[0].mxu0
        %1690 = vmatprep.mubr.bf16.mxu0 0
        %1691 = vmatmul.mubr.bf16.gmra.mrb[0].mxu0 %v1412
        %v1692 = vpop.f32.mrb[0].mxu0
        %v1693 = vadd.f32 %v1043, %v1692
        %v1694 = vpop.f32.mrb[0].mxu0
        %v1695 = vpop.f32.mrb[0].mxu0
        %v1696 = vadd.f32 %v1043, %v1695
        %v1697 = vpop.f32.mrb[0].mxu0
        %1698 = vmatprep.mubr.bf16.mxu0 0
        %1699 = vmatmul.mubr.bf16.gmra.mrb[0].mxu0 %v1415
        %v1700 = vpop.f32.mrb[0].mxu0
        %v1701 = vadd.f32 %v1043, %v1700
        %v1702 = vpop.f32.mrb[0].mxu0
        %v1703 = vpop.f32.mrb[0].mxu0
        %v1704 = vadd.f32 %v1043, %v1703
        %v1705 = vpop.f32.mrb[0].mxu0
        %1706 = vmatprep.mubr.bf16.mxu0 0
        %1707 = vmatmul.mubr.bf16.gmra.mrb[0].mxu0 %v1418
        %v1708 = vpop.f32.mrb[0].mxu0
        %v1709 = vadd.f32 %v1043, %v1708
        %v1710 = vpop.f32.mrb[0].mxu0
        %v1711 = vpop.f32.mrb[0].mxu0
        %v1712 = vadd.f32 %v1043, %v1711
        %v1713 = vpop.f32.mrb[0].mxu0
        %1714 = vmatprep.mubr.bf16.mxu0 0
        %1715 = vmatmul.mubr.bf16.gmra.mrb[0].mxu0 %v1421
        %v1716 = vpop.f32.mrb[0].mxu0
        %v1717 = vadd.f32 %v1043, %v1716
        %v1718 = vpop.f32.mrb[0].mxu0
        %v1719 = vpop.f32.mrb[0].mxu0
        %v1720 = vadd.f32 %v1043, %v1719
        %v1721 = vpop.f32.mrb[0].mxu0
        %1722 = vmatprep.mubr.bf16.mxu0 0
        %1723 = vmatmul.mubr.bf16.gmra.mrb[0].mxu0 %v1424
        %v1724 = vpop.f32.mrb[0].mxu0
        %v1725 = vadd.f32 %v1043, %v1724
        %v1726 = vpop.f32.mrb[0].mxu0
        %v1727 = vpop.f32.mrb[0].mxu0
        %v1728 = vadd.f32 %v1043, %v1727
        %v1729 = vpop.f32.mrb[0].mxu0
        %1730 = vmatprep.mubr.bf16.mxu0 0
        %1731 = vmatmul.mubr.bf16.gmra.mrb[0].mxu0 %v1427
        %v1732 = vpop.f32.mrb[0].mxu0
        %v1733 = vadd.f32 %v1043, %v1732
        %v1734 = vpop.f32.mrb[0].mxu0
        %v1735 = vpop.f32.mrb[0].mxu0
        %v1736 = vadd.f32 %v1043, %v1735
        %v1737 = vpop.f32.mrb[0].mxu0
        %1738 = vmatprep.mubr.bf16.mxu0 0
        %1739 = vmatmul.mubr.bf16.gmra.mrb[0].mxu0 %v1430
        %v1740 = vpop.f32.mrb[0].mxu0
        %v1741 = vadd.f32 %v1043, %v1740
        %v1742 = vpop.f32.mrb[0].mxu0
        %v1743 = vpop.f32.mrb[0].mxu0
        %v1744 = vadd.f32 %v1043, %v1743
        %v1745 = vpop.f32.mrb[0].mxu0
        %1746 = vmatprep.mubr.bf16.mxu0 0
        %1747 = vmatmul.mubr.bf16.gmra.mrb[0].mxu0 %v1433
        %v1748 = vpop.f32.mrb[0].mxu0
        %v1749 = vadd.f32 %v1043, %v1748
        %v1750 = vpop.f32.mrb[0].mxu0
        %v1751 = vpop.f32.mrb[0].mxu0
        %v1752 = vadd.f32 %v1043, %v1751
        %v1753 = vpop.f32.mrb[0].mxu0
        %1754 = vmatprep.mubr.bf16.mxu0 0
        %1755 = vmatmul.mubr.bf16.gmra.mrb[0].mxu0 %v1436
        %v1756 = vpop.f32.mrb[0].mxu0
        %v1757 = vadd.f32 %v1043, %v1756
        %v1758 = vpop.f32.mrb[0].mxu0
        %v1759 = vpop.f32.mrb[0].mxu0
        %v1760 = vadd.f32 %v1043, %v1759
        %v1761 = vpop.f32.mrb[0].mxu0
        %1762 = vmatprep.mubr.bf16.mxu0 0
        %1763 = vmatmul.mubr.bf16.gmra.mrb[0].mxu0 %v1439
        %v1764 = vpop.f32.mrb[0].mxu0
        %v1765 = vadd.f32 %v1043, %v1764
        %v1766 = vpop.f32.mrb[0].mxu0
        %v1767 = vpop.f32.mrb[0].mxu0
        %v1768 = vadd.f32 %v1043, %v1767
        %v1769 = vpop.f32.mrb[0].mxu0
        %1770 = vmatprep.mubr.bf16.mxu0 0
        %1771 = vmatmul.mubr.bf16.gmra.mrb[0].mxu0 %v1442
        %v1772 = vpop.f32.mrb[0].mxu0
        %v1773 = vadd.f32 %v1043, %v1772
        %v1774 = vpop.f32.mrb[0].mxu0
        %v1775 = vpop.f32.mrb[0].mxu0
        %v1776 = vadd.f32 %v1043, %v1775
        %v1777 = vpop.f32.mrb[0].mxu0
        %1778 = vmatprep.mubr.bf16.mxu0 0
        %1779 = vmatmul.mubr.bf16.gmra.mrb[0].mxu0 %v1445
        %v1780 = vpop.f32.mrb[0].mxu0
        %v1781 = vadd.f32 %v1043, %v1780
        %v1782 = vpop.f32.mrb[0].mxu0
        %v1783 = vpop.f32.mrb[0].mxu0
        %v1784 = vadd.f32 %v1043, %v1783
        %v1785 = vpop.f32.mrb[0].mxu0
        %1786 = vmatprep.mubr.bf16.mxu0 0
        %1787 = vmatmul.mubr.bf16.gmra.mrb[0].mxu0 %v1448
        %v1788 = vpop.f32.mrb[0].mxu0
        %v1789 = vadd.f32 %v1043, %v1788
        %v1790 = vpop.f32.mrb[0].mxu0
        %v1791 = vpop.f32.mrb[0].mxu0
        %v1792 = vadd.f32 %v1043, %v1791
        %v1793 = vpop.f32.mrb[0].mxu0
        %1794 = vmatprep.mubr.bf16.mxu0 0
        %1795 = vmatmul.mubr.bf16.gmra.mrb[0].mxu0 %v1451
        %v1796 = vpop.f32.mrb[0].mxu0
        %v1797 = vadd.f32 %v1043, %v1796
        %v1798 = vpop.f32.mrb[0].mxu0
        %v1799 = vpop.f32.mrb[0].mxu0
        %v1800 = vadd.f32 %v1043, %v1799
        %v1801 = vpop.f32.mrb[0].mxu0
        %1802 = vmatprep.mubr.bf16.mxu0 0
        %1803 = vmatmul.mubr.bf16.gmra.mrb[0].mxu0 %v1454
        %v1804 = vpop.f32.mrb[0].mxu0
        %v1805 = vadd.f32 %v1043, %v1804
        %v1806 = vpop.f32.mrb[0].mxu0
        %v1807 = vpop.f32.mrb[0].mxu0
        %v1808 = vadd.f32 %v1043, %v1807
        %v1809 = vpop.f32.mrb[0].mxu0
        %1810 = vmatprep.mubr.bf16.mxu0 0
        %1811 = vmatmul.mubr.bf16.gmra.mrb[0].mxu0 %v1457
        %v1812 = vpop.f32.mrb[0].mxu0
        %v1813 = vadd.f32 %v1043, %v1812
        %v1814 = vpop.f32.mrb[0].mxu0
        %v1815 = vpop.f32.mrb[0].mxu0
        %v1816 = vadd.f32 %v1043, %v1815
        %v1817 = vpop.f32.mrb[0].mxu0
        %1818 = vmatprep.mubr.bf16.mxu0 0
        %1819 = vmatmul.mubr.bf16.gmra.mrb[0].mxu0 %v1460
        %v1820 = vpop.f32.mrb[0].mxu0
        %v1821 = vadd.f32 %v1043, %v1820
        %v1822 = vpop.f32.mrb[0].mxu0
        %v1823 = vpop.f32.mrb[0].mxu0
        %v1824 = vadd.f32 %v1043, %v1823
        %v1825 = vpop.f32.mrb[0].mxu0
        %1826 = vmatprep.mubr.bf16.mxu0 0
        %1827 = vmatmul.mubr.bf16.gmra.mrb[0].mxu0 %v1463
        %v1828 = vpop.f32.mrb[0].mxu0
        %v1829 = vadd.f32 %v1043, %v1828
        %v1830 = vpop.f32.mrb[0].mxu0
        %v1831 = vpop.f32.mrb[0].mxu0
        %v1832 = vadd.f32 %v1043, %v1831
        %v1833 = vpop.f32.mrb[0].mxu0
        %1834 = vmatprep.mubr.bf16.mxu0 0
        %1835 = vmatmul.mubr.bf16.gmra.mrb[0].mxu0 %v1466
        %v1836 = vpop.f32.mrb[0].mxu0
        %v1837 = vadd.f32 %v1043, %v1836
        %v1838 = vpop.f32.mrb[0].mxu0
        %v1839 = vpop.f32.mrb[0].mxu0
        %v1840 = vadd.f32 %v1043, %v1839
        %v1841 = vpop.f32.mrb[0].mxu0
        %1842 = vmatprep.mubr.bf16.mxu0 0
        %1843 = vmatmul.mubr.bf16.gmra.mrb[0].mxu0 %v1469
        %v1844 = vpop.f32.mrb[0].mxu0
        %v1845 = vadd.f32 %v1043, %v1844
        %v1846 = vpop.f32.mrb[0].mxu0
        %v1847 = vpop.f32.mrb[0].mxu0
        %v1848 = vadd.f32 %v1043, %v1847
        %v1849 = vpop.f32.mrb[0].mxu0
        %1850 = vmatprep.mubr.bf16.mxu0 0
        %1851 = vmatmul.mubr.bf16.gmra.mrb[0].mxu0 %v1472
        %v1852 = vpop.f32.mrb[0].mxu0
        %v1853 = vadd.f32 %v1043, %v1852
        %v1854 = vpop.f32.mrb[0].mxu0
        %v1855 = vpop.f32.mrb[0].mxu0
        %v1856 = vadd.f32 %v1043, %v1855
        %v1857 = vpop.f32.mrb[0].mxu0
        %1858 = vmatprep.mubr.bf16.mxu0 0
        %1859 = vmatmul.mubr.bf16.gmra.mrb[0].mxu0 %v1475
        %v1860 = vpop.f32.mrb[0].mxu0
        %v1861 = vadd.f32 %v1043, %v1860
        %v1862 = vpop.f32.mrb[0].mxu0
        %v1863 = vpop.f32.mrb[0].mxu0
        %v1864 = vadd.f32 %v1043, %v1863
        %v1865 = vpop.f32.mrb[0].mxu0
        %1866 = vmatprep.mubr.bf16.mxu0 0
        %1867 = vmatmul.mubr.bf16.gmra.mrb[0].mxu0 %v1478
        %v1868 = vpop.f32.mrb[0].mxu0
        %v1869 = vadd.f32 %v1043, %v1868
        %v1870 = vpop.f32.mrb[0].mxu0
        %v1871 = vpop.f32.mrb[0].mxu0
        %v1872 = vadd.f32 %v1043, %v1871
        %v1873 = vpop.f32.mrb[0].mxu0
        %1874 = vmatprep.mubr.bf16.mxu0 0
        %1875 = vmatmul.mubr.bf16.gmra.mrb[0].mxu0 %v1481
        %v1876 = vpop.f32.mrb[0].mxu0
        %v1877 = vadd.f32 %v1043, %v1876
        %v1878 = vpop.f32.mrb[0].mxu0
        %v1879 = vpop.f32.mrb[0].mxu0
        %v1880 = vadd.f32 %v1043, %v1879
        %v1881 = vpop.f32.mrb[0].mxu0
        %1882 = vmatprep.mubr.bf16.mxu0 0
        %1883 = vmatmul.mubr.bf16.gmra.mrb[0].mxu0 %v1484
        %v1884 = vpop.f32.mrb[0].mxu0
        %v1885 = vadd.f32 %v1043, %v1884
        %v1886 = vpop.f32.mrb[0].mxu0
        %v1887 = vpop.f32.mrb[0].mxu0
        %v1888 = vadd.f32 %v1043, %v1887
        %v1889 = vpop.f32.mrb[0].mxu0
        %1890 = vmatprep.mubr.bf16.mxu0 0
        %1891 = vmatmul.mubr.bf16.gmra.mrb[0].mxu0 %v1487
        %v1892 = vpop.f32.mrb[0].mxu0
        %v1893 = vadd.f32 %v1043, %v1892
        %v1894 = vpop.f32.mrb[0].mxu0
        %v1895 = vpop.f32.mrb[0].mxu0
        %v1896 = vadd.f32 %v1043, %v1895
        %v1897 = vpop.f32.mrb[0].mxu0
        %1898 = vmatprep.mubr.bf16.mxu0 0
        %1899 = vmatmul.mubr.bf16.gmra.mrb[0].mxu0 %v1490
        %v1900 = vpop.f32.mrb[0].mxu0
        %v1901 = vadd.f32 %v1043, %v1900
        %v1902 = vpop.f32.mrb[0].mxu0
        %v1903 = vpop.f32.mrb[0].mxu0
        %v1904 = vadd.f32 %v1043, %v1903
        %v1905 = vpop.f32.mrb[0].mxu0
        %1906 = vmatprep.mubr.bf16.mxu0 0
        %1907 = vmatmul.mubr.bf16.gmra.mrb[0].mxu0 %v1493
        %v1908 = vpop.f32.mrb[0].mxu0
        %v1909 = vadd.f32 %v1043, %v1908
        %v1910 = vpop.f32.mrb[0].mxu0
        %v1911 = vpop.f32.mrb[0].mxu0
        %v1912 = vadd.f32 %v1043, %v1911
        %v1913 = vpop.f32.mrb[0].mxu0
        %1914 = vmatprep.mubr.bf16.mxu0 0
        %1915 = vmatmul.mubr.bf16.gmra.mrb[0].mxu0 %v1496
        %v1916 = vpop.f32.mrb[0].mxu0
        %v1917 = vadd.f32 %v1043, %v1916
        %v1918 = vpop.f32.mrb[0].mxu0
        %v1919 = vpop.f32.mrb[0].mxu0
        %v1920 = vadd.f32 %v1043, %v1919
        %v1921 = vpop.f32.mrb[0].mxu0
        %1922 = vmatprep.mubr.bf16.mxu0 0
        %1923 = vmatmul.mubr.bf16.gmra.mrb[0].mxu0 %v1499
        %v1924 = vpop.f32.mrb[0].mxu0
        %v1925 = vadd.f32 %v1043, %v1924
        %v1926 = vpop.f32.mrb[0].mxu0
        %v1927 = vpop.f32.mrb[0].mxu0
        %v1928 = vadd.f32 %v1043, %v1927
        %v1929 = vpop.f32.mrb[0].mxu0
        %1930 = vmatprep.mubr.bf16.mxu0 0
        %1931 = vmatmul.mubr.bf16.gmra.mrb[0].mxu0 %v1502
        %v1932 = vpop.f32.mrb[0].mxu0
        %v1933 = vadd.f32 %v1043, %v1932
        %v1934 = vpop.f32.mrb[0].mxu0
        %v1935 = vpop.f32.mrb[0].mxu0
        %v1936 = vadd.f32 %v1043, %v1935
        %v1937 = vpop.f32.mrb[0].mxu0
        %1938 = vmatprep.mubr.bf16.mxu0 0
        %1939 = vmatmul.mubr.bf16.gmra.mrb[0].mxu0 %v1505
        %v1940 = vpop.f32.mrb[0].mxu0
        %v1941 = vadd.f32 %v1043, %v1940
        %v1942 = vpop.f32.mrb[0].mxu0
        %v1943 = vpop.f32.mrb[0].mxu0
        %v1944 = vadd.f32 %v1043, %v1943
        %v1945 = vpop.f32.mrb[0].mxu0
        %1946 = vmatprep.mubr.bf16.mxu0 0
        %1947 = vmatmul.mubr.bf16.gmra.mrb[0].mxu0 %v1508
        %v1948 = vpop.f32.mrb[0].mxu0
        %v1949 = vadd.f32 %v1043, %v1948
        %v1950 = vpop.f32.mrb[0].mxu0
        %v1951 = vpop.f32.mrb[0].mxu0
        %v1952 = vadd.f32 %v1043, %v1951
        %v1953 = vpop.f32.mrb[0].mxu0
        %1954 = vmatprep.mubr.bf16.mxu0 0
        %1955 = vmatmul.mubr.bf16.gmra.mrb[0].mxu0 %v1511
        %v1956 = vpop.f32.mrb[0].mxu0
        %v1957 = vadd.f32 %v1043, %v1956
        %v1958 = vpop.f32.mrb[0].mxu0
        %v1959 = vpop.f32.mrb[0].mxu0
        %v1960 = vadd.f32 %v1043, %v1959
        %v1961 = vpop.f32.mrb[0].mxu0
        %1962 = vmatprep.mubr.bf16.mxu0 0
        %1963 = vmatmul.mubr.bf16.gmra.mrb[0].mxu0 %v1514
        %v1964 = vpop.f32.mrb[0].mxu0
        %v1965 = vadd.f32 %v1043, %v1964
        %v1966 = vpop.f32.mrb[0].mxu0
        %v1967 = vpop.f32.mrb[0].mxu0
        %v1968 = vadd.f32 %v1043, %v1967
        %v1969 = vpop.f32.mrb[0].mxu0
        %1970 = vmatprep.mubr.bf16.mxu0 0
        %1971 = vmatmul.mubr.bf16.gmra.mrb[0].mxu0 %v1517
        %v1972 = vpop.f32.mrb[0].mxu0
        %v1973 = vadd.f32 %v1043, %v1972
        %v1974 = vpop.f32.mrb[0].mxu0
        %v1975 = vpop.f32.mrb[0].mxu0
        %v1976 = vadd.f32 %v1043, %v1975
        %v1977 = vpop.f32.mrb[0].mxu0
        %1978 = vmatprep.mubr.bf16.mxu0 0
        %1979 = vmatmul.mubr.bf16.gmra.mrb[0].mxu0 %v1520
        %v1980 = vpop.f32.mrb[0].mxu0
        %v1981 = vadd.f32 %v1043, %v1980
        %v1982 = vpop.f32.mrb[0].mxu0
        %v1983 = vpop.f32.mrb[0].mxu0
        %v1984 = vadd.f32 %v1043, %v1983
        %v1985 = vpop.f32.mrb[0].mxu0
        %1986 = vmatprep.mubr.bf16.mxu0 0
        %1987 = vmatmul.mubr.bf16.gmra.mrb[0].mxu0 %v1523
        %v1988 = vpop.f32.mrb[0].mxu0
        %v1989 = vadd.f32 %v1043, %v1988
        %v1990 = vpop.f32.mrb[0].mxu0
        %v1991 = vpop.f32.mrb[0].mxu0
        %v1992 = vadd.f32 %v1043, %v1991
        %v1993 = vpop.f32.mrb[0].mxu0
        %1994 = vmatprep.mubr.bf16.mxu0 0
        %1995 = vmatmul.mubr.bf16.gmra.mrb[0].mxu0 %v1526
        %v1996 = vpop.f32.mrb[0].mxu0
        %v1997 = vadd.f32 %v1043, %v1996
        %v1998 = vpop.f32.mrb[0].mxu0
        %v1999 = vpop.f32.mrb[0].mxu0
        %v2000 = vadd.f32 %v1043, %v1999
        %v2001 = vpop.f32.mrb[0].mxu0
        %2002 = vmatprep.mubr.bf16.mxu0 0
        %2003 = vmatmul.mubr.bf16.gmra.mrb[0].mxu0 %v1529
        %v2004 = vpop.f32.mrb[0].mxu0
        %v2005 = vadd.f32 %v1043, %v2004
        %v2006 = vpop.f32.mrb[0].mxu0
        %v2007 = vpop.f32.mrb[0].mxu0
        %v2008 = vadd.f32 %v1043, %v2007
        %v2009 = vpop.f32.mrb[0].mxu0
        %2010 = vmatprep.mubr.bf16.mxu0 0
        %2011 = vmatmul.mubr.bf16.gmra.mrb[0].mxu0 %v1532
        %v2012 = vpop.f32.mrb[0].mxu0
        %v2013 = vadd.f32 %v1043, %v2012
        %v2014 = vpop.f32.mrb[0].mxu0
        %v2015 = vpop.f32.mrb[0].mxu0
        %v2016 = vadd.f32 %v1043, %v2015
        %v2017 = vpop.f32.mrb[0].mxu0
        %2018 = vmatprep.mubr.bf16.mxu0 0
        %2019 = vmatmul.mubr.bf16.gmra.mrb[0].mxu0 %v1535
        %v2020 = vpop.f32.mrb[0].mxu0
        %v2021 = vadd.f32 %v1043, %v2020
        %v2022 = vpop.f32.mrb[0].mxu0
        %v2023 = vpop.f32.mrb[0].mxu0
        %v2024 = vadd.f32 %v1043, %v2023
        %v2025 = vpop.f32.mrb[0].mxu0
        %2026 = vmatprep.mubr.bf16.mxu0 0
        %2027 = vmatmul.mubr.bf16.gmra.mrb[0].mxu0 %v1538
        %v2028 = vpop.f32.mrb[0].mxu0
        %v2029 = vadd.f32 %v1043, %v2028
        %v2030 = vpop.f32.mrb[0].mxu0
        %v2031 = vpop.f32.mrb[0].mxu0
        %v2032 = vadd.f32 %v1043, %v2031
        %v2033 = vpop.f32.mrb[0].mxu0
        %2034 = vmatprep.mubr.bf16.mxu0 0
        %2035 = vmatmul.mubr.bf16.gmra.mrb[0].mxu0 %v1541
        %v2036 = vpop.f32.mrb[0].mxu0
        %v2037 = vadd.f32 %v1043, %v2036
        %v2038 = vpop.f32.mrb[0].mxu0
        %v2039 = vpop.f32.mrb[0].mxu0
        %v2040 = vadd.f32 %v1043, %v2039
        %v2041 = vpop.f32.mrb[0].mxu0
        %2042 = vmatprep.mubr.bf16.mxu0 0
        %2043 = vmatmul.mubr.bf16.gmra.mrb[0].mxu0 %v1544
        %v2044 = vpop.f32.mrb[0].mxu0
        %v2045 = vadd.f32 %v1043, %v2044
        %v2046 = vpop.f32.mrb[0].mxu0
        %v2047 = vpop.f32.mrb[0].mxu0
        %v2048 = vadd.f32 %v1043, %v2047
        %v2049 = vpop.f32.mrb[0].mxu0
        %2050 = vmatprep.mubr.bf16.mxu0 0
        %2051 = vmatmul.mubr.bf16.gmra.mrb[0].mxu0 %v1547
        %v2052 = vpop.f32.mrb[0].mxu0
        %v2053 = vadd.f32 %v1043, %v2052
        %v2054 = vpop.f32.mrb[0].mxu0
        %v2055 = vpop.f32.mrb[0].mxu0
        %v2056 = vadd.f32 %v1043, %v2055
        %v2057 = vpop.f32.mrb[0].mxu0
        %2058 = vmatprep.mubr.bf16.mxu0 0
        %2059 = vmatmul.mubr.bf16.gmra.mrb[0].mxu0 %v1550
        %v2060 = vpop.f32.mrb[0].mxu0
        %v2061 = vadd.f32 %v1043, %v2060
        %v2062 = vpop.f32.mrb[0].mxu0
        %v2063 = vpop.f32.mrb[0].mxu0
        %v2064 = vadd.f32 %v1043, %v2063
        %v2065 = vpop.f32.mrb[0].mxu0
        %2066 = vmatprep.mubr.bf16.mxu0 0
        %2067 = vmatmul.mubr.bf16.gmra.mrb[0].mxu0 %v1553
        %v2068 = vpop.f32.mrb[0].mxu0
        %v2069 = vadd.f32 %v1043, %v2068
        %v2070 = vpop.f32.mrb[0].mxu0
        %v2071 = vpop.f32.mrb[0].mxu0
        %v2072 = vadd.f32 %v1043, %v2071
        %v2073 = vpop.f32.mrb[0].mxu0
        %2074 = vmatprep.mubr.bf16.mxu0 0
        %2075 = vmatmul.mubr.bf16.gmra.mrb[0].mxu0 %v1556
        %v2076 = vpop.f32.mrb[0].mxu0
        %v2077 = vadd.f32 %v1043, %v2076
        %v2078 = vpop.f32.mrb[0].mxu0
        %v2079 = vpop.f32.mrb[0].mxu0
        %v2080 = vadd.f32 %v1043, %v2079
        %v2081 = vpop.f32.mrb[0].mxu0
        %2082 = vmatprep.mubr.bf16.mxu0 0
        %2083 = vmatmul.mubr.bf16.gmra.mrb[0].mxu0 %v1559
        %v2084 = vpop.f32.mrb[0].mxu0
        %v2085 = vadd.f32 %v1043, %v2084
        %v2086 = vpop.f32.mrb[0].mxu0
        %v2087 = vpop.f32.mrb[0].mxu0
        %v2088 = vadd.f32 %v1043, %v2087
        %v2089 = vpop.f32.mrb[0].mxu0
        %2090 = vmatprep.mubr.bf16.mxu0 0
        %2091 = vmatmul.mubr.bf16.gmra.mrb[0].mxu0 %v1562
        %v2092 = vpop.f32.mrb[0].mxu0
        %v2093 = vadd.f32 %v1043, %v2092
        %v2094 = vpop.f32.mrb[0].mxu0
        %v2095 = vpop.f32.mrb[0].mxu0
        %v2096 = vadd.f32 %v1043, %v2095
        %v2097 = vpop.f32.mrb[0].mxu0
        %2098 = vmatprep.mubr.bf16.mxu0 0
        %2099 = vmatmul.mubr.bf16.gmra.mrb[0].mxu0 %v1565
        %v2100 = vpop.f32.mrb[0].mxu0
        %v2101 = vadd.f32 %v1043, %v2100
        %v2102 = vpop.f32.mrb[0].mxu0
        %v2103 = vpop.f32.mrb[0].mxu0
        %v2104 = vadd.f32 %v1043, %v2103
        %v2105 = vpop.f32.mrb[0].mxu0
        %2106 = vmatprep.mubr.bf16.mxu0 0
        %2107 = vmatmul.mubr.bf16.gmra.mrb[0].mxu0 %v1568
        %v2108 = vpop.f32.mrb[0].mxu0
        %v2109 = vadd.f32 %v1043, %v2108
        %v2110 = vpop.f32.mrb[0].mxu0
        %v2111 = vpop.f32.mrb[0].mxu0
        %v2112 = vadd.f32 %v1043, %v2111
        %v2113 = vpop.f32.mrb[0].mxu0
        %2114 = vdwg.mxu0
        %v2115 = vmax.f32 %v1605, 0.0
        %v2116 = vmax.f32 %v1608, 0.0
        %v2117 = vmax.f32 %v1613, 0.0
        %v2118 = vmax.f32 %v1616, 0.0
        %v2119 = vmax.f32 %v1621, 0.0
        %v2120 = vmax.f32 %v1624, 0.0
        %v2121 = vmax.f32 %v1629, 0.0
        %v2122 = vmax.f32 %v1632, 0.0
        %v2123 = vmax.f32 %v1637, 0.0
        %v2124 = vmax.f32 %v1640, 0.0
        %v2125 = vmax.f32 %v1645, 0.0
        %v2126 = vmax.f32 %v1648, 0.0
        %v2127 = vmax.f32 %v1653, 0.0
        %v2128 = vmax.f32 %v1656, 0.0
        %v2129 = vmax.f32 %v1661, 0.0
        %v2130 = vmax.f32 %v1664, 0.0
        %v2131 = vmax.f32 %v1669, 0.0
        %v2132 = vmax.f32 %v1672, 0.0
        %v2133 = vmax.f32 %v1677, 0.0
        %v2134 = vmax.f32 %v1680, 0.0
        %v2135 = vmax.f32 %v1685, 0.0
        %v2136 = vmax.f32 %v1688, 0.0
        %v2137 = vmax.f32 %v1693, 0.0
        %v2138 = vmax.f32 %v1696, 0.0
        %v2139 = vmax.f32 %v1701, 0.0
        %v2140 = vmax.f32 %v1704, 0.0
        %v2141 = vmax.f32 %v1709, 0.0
        %v2142 = vmax.f32 %v1712, 0.0
        %v2143 = vmax.f32 %v1717, 0.0
        %v2144 = vmax.f32 %v1720, 0.0
        %v2145 = vmax.f32 %v1725, 0.0
        %v2146 = vmax.f32 %v1728, 0.0
        %v2147 = vmax.f32 %v1733, 0.0
        %v2148 = vmax.f32 %v1736, 0.0
        %v2149 = vmax.f32 %v1741, 0.0
        %v2150 = vmax.f32 %v1744, 0.0
        %v2151 = vmax.f32 %v1749, 0.0
        %v2152 = vmax.f32 %v1752, 0.0
        %v2153 = vmax.f32 %v1757, 0.0
        %v2154 = vmax.f32 %v1760, 0.0
        %v2155 = vmax.f32 %v1765, 0.0
        %v2156 = vmax.f32 %v1768, 0.0
        %v2157 = vmax.f32 %v1773, 0.0
        %v2158 = vmax.f32 %v1776, 0.0
        %v2159 = vmax.f32 %v1781, 0.0
        %v2160 = vmax.f32 %v1784, 0.0
        %v2161 = vmax.f32 %v1789, 0.0
        %v2162 = vmax.f32 %v1792, 0.0
        %v2163 = vmax.f32 %v1797, 0.0
        %v2164 = vmax.f32 %v1800, 0.0
        %v2165 = vmax.f32 %v1805, 0.0
        %v2166 = vmax.f32 %v1808, 0.0
        %v2167 = vmax.f32 %v1813, 0.0
        %v2168 = vmax.f32 %v1816, 0.0
        %v2169 = vmax.f32 %v1821, 0.0
        %v2170 = vmax.f32 %v1824, 0.0
        %v2171 = vmax.f32 %v1829, 0.0
        %v2172 = vmax.f32 %v1832, 0.0
        %v2173 = vmax.f32 %v1837, 0.0
        %v2174 = vmax.f32 %v1840, 0.0
        %v2175 = vmax.f32 %v1845, 0.0
        %v2176 = vmax.f32 %v1848, 0.0
        %v2177 = vmax.f32 %v1853, 0.0
        %v2178 = vmax.f32 %v1856, 0.0
        %v2179 = vmax.f32 %v1861, 0.0
        %v2180 = vmax.f32 %v1864, 0.0
        %v2181 = vmax.f32 %v1869, 0.0
        %v2182 = vmax.f32 %v1872, 0.0
        %v2183 = vmax.f32 %v1877, 0.0
        %v2184 = vmax.f32 %v1880, 0.0
        %v2185 = vmax.f32 %v1885, 0.0
        %v2186 = vmax.f32 %v1888, 0.0
        %v2187 = vmax.f32 %v1893, 0.0
        %v2188 = vmax.f32 %v1896, 0.0
        %v2189 = vmax.f32 %v1901, 0.0
        %v2190 = vmax.f32 %v1904, 0.0
        %v2191 = vmax.f32 %v1909, 0.0
        %v2192 = vmax.f32 %v1912, 0.0
        %v2193 = vmax.f32 %v1917, 0.0
        %v2194 = vmax.f32 %v1920, 0.0
        %v2195 = vmax.f32 %v1925, 0.0
        %v2196 = vmax.f32 %v1928, 0.0
        %v2197 = vmax.f32 %v1933, 0.0
        %v2198 = vmax.f32 %v1936, 0.0
        %v2199 = vmax.f32 %v1941, 0.0
        %v2200 = vmax.f32 %v1944, 0.0
        %v2201 = vmax.f32 %v1949, 0.0
        %v2202 = vmax.f32 %v1952, 0.0
        %v2203 = vmax.f32 %v1957, 0.0
        %v2204 = vmax.f32 %v1960, 0.0
        %v2205 = vmax.f32 %v1965, 0.0
        %v2206 = vmax.f32 %v1968, 0.0
        %v2207 = vmax.f32 %v1973, 0.0
        %v2208 = vmax.f32 %v1976, 0.0
        %v2209 = vmax.f32 %v1981, 0.0
        %v2210 = vmax.f32 %v1984, 0.0
        %v2211 = vmax.f32 %v1989, 0.0
        %v2212 = vmax.f32 %v1992, 0.0
        %v2213 = vmax.f32 %v1997, 0.0
        %v2214 = vmax.f32 %v2000, 0.0
        %v2215 = vmax.f32 %v2005, 0.0
        %v2216 = vmax.f32 %v2008, 0.0
        %v2217 = vmax.f32 %v2013, 0.0
        %v2218 = vmax.f32 %v2016, 0.0
        %v2219 = vmax.f32 %v2021, 0.0
        %v2220 = vmax.f32 %v2024, 0.0
        %v2221 = vmax.f32 %v2029, 0.0
        %v2222 = vmax.f32 %v2032, 0.0
        %v2223 = vmax.f32 %v2037, 0.0
        %v2224 = vmax.f32 %v2040, 0.0
        %v2225 = vmax.f32 %v2045, 0.0
        %v2226 = vmax.f32 %v2048, 0.0
        %v2227 = vmax.f32 %v2053, 0.0
        %v2228 = vmax.f32 %v2056, 0.0
        %v2229 = vmax.f32 %v2061, 0.0
        %v2230 = vmax.f32 %v2064, 0.0
        %v2231 = vmax.f32 %v2069, 0.0
        %v2232 = vmax.f32 %v2072, 0.0
        %v2233 = vmax.f32 %v2077, 0.0
        %v2234 = vmax.f32 %v2080, 0.0
        %v2235 = vmax.f32 %v2085, 0.0
        %v2236 = vmax.f32 %v2088, 0.0
        %v2237 = vmax.f32 %v2093, 0.0
        %v2238 = vmax.f32 %v2096, 0.0
        %v2239 = vmax.f32 %v2101, 0.0
        %v2240 = vmax.f32 %v2104, 0.0
        %v2241 = vmax.f32 %v2109, 0.0
        %v2242 = vmax.f32 %v2112, 0.0
        %v2243 = vld [vmem:[#allocation2] sm:$0xff]
        %v2244 = vadd.f32 %v2115, %v2116
        %v2245 = vadd.f32 %v2244, %v2117
        %v2246 = vadd.f32 %v2245, %v2118
        %v2247 = vadd.f32 %v2246, %v2119
        %v2248 = vadd.f32 %v2247, %v2120
        %v2249 = vadd.f32 %v2248, %v2121
        %v2250 = vadd.f32 %v2249, %v2122
        %v2251 = vadd.f32 %v2250, %v2123
        %v2252 = vadd.f32 %v2251, %v2124
        %v2253 = vadd.f32 %v2252, %v2125
        %v2254 = vadd.f32 %v2253, %v2126
        %v2255 = vadd.f32 %v2254, %v2127
        %v2256 = vadd.f32 %v2255, %v2128
        %v2257 = vadd.f32 %v2256, %v2129
        %v2258 = vadd.f32 %v2257, %v2130
        %v2259 = vrot.slane %v2258, 4
        %v2260 = vadd.f32 %v2258, %v2259
        %v2261 = vrot.slane %v2260, 2
        %v2262 = vadd.f32 %v2260, %v2261
        %v2263 = vrot.slane %v2262, 1
        %v2264 = vadd.f32 %v2262, %v2263
        %v2265 = vadd.f32 %v2131, %v2132
        %v2266 = vadd.f32 %v2265, %v2133
        %v2267 = vadd.f32 %v2266, %v2134
        %v2268 = vadd.f32 %v2267, %v2135
        %v2269 = vadd.f32 %v2268, %v2136
        %v2270 = vadd.f32 %v2269, %v2137
        %v2271 = vadd.f32 %v2270, %v2138
        %v2272 = vadd.f32 %v2271, %v2139
        %v2273 = vadd.f32 %v2272, %v2140
        %v2274 = vadd.f32 %v2273, %v2141
        %v2275 = vadd.f32 %v2274, %v2142
        %v2276 = vadd.f32 %v2275, %v2143
        %v2277 = vadd.f32 %v2276, %v2144
        %v2278 = vadd.f32 %v2277, %v2145
        %v2279 = vadd.f32 %v2278, %v2146
        %v2280 = vrot.slane %v2279, 4
        %v2281 = vadd.f32 %v2279, %v2280
        %v2282 = vrot.slane %v2281, 2
        %v2283 = vadd.f32 %v2281, %v2282
        %v2284 = vrot.slane %v2283, 1
        %v2285 = vadd.f32 %v2283, %v2284
        %v2286 = vadd.f32 %v2147, %v2148
        %v2287 = vadd.f32 %v2286, %v2149
        %v2288 = vadd.f32 %v2287, %v2150
        %v2289 = vadd.f32 %v2288, %v2151
        %v2290 = vadd.f32 %v2289, %v2152
        %v2291 = vadd.f32 %v2290, %v2153
        %v2292 = vadd.f32 %v2291, %v2154
        %v2293 = vadd.f32 %v2292, %v2155
        %v2294 = vadd.f32 %v2293, %v2156
        %v2295 = vadd.f32 %v2294, %v2157
        %v2296 = vadd.f32 %v2295, %v2158
        %v2297 = vadd.f32 %v2296, %v2159
        %v2298 = vadd.f32 %v2297, %v2160
        %v2299 = vadd.f32 %v2298, %v2161
        %v2300 = vadd.f32 %v2299, %v2162
        %v2301 = vrot.slane %v2300, 4
        %v2302 = vadd.f32 %v2300, %v2301
        %v2303 = vrot.slane %v2302, 2
        %v2304 = vadd.f32 %v2302, %v2303
        %v2305 = vrot.slane %v2304, 1
        %v2306 = vadd.f32 %v2304, %v2305
        %v2307 = vadd.f32 %v2163, %v2164
        %v2308 = vadd.f32 %v2307, %v2165
        %v2309 = vadd.f32 %v2308, %v2166
        %v2310 = vadd.f32 %v2309, %v2167
        %v2311 = vadd.f32 %v2310, %v2168
        %v2312 = vadd.f32 %v2311, %v2169
        %v2313 = vadd.f32 %v2312, %v2170
        %v2314 = vadd.f32 %v2313, %v2171
        %v2315 = vadd.f32 %v2314, %v2172
        %v2316 = vadd.f32 %v2315, %v2173
        %v2317 = vadd.f32 %v2316, %v2174
        %v2318 = vadd.f32 %v2317, %v2175
        %v2319 = vadd.f32 %v2318, %v2176
        %v2320 = vadd.f32 %v2319, %v2177
        %v2321 = vadd.f32 %v2320, %v2178
        %v2322 = vrot.slane %v2321, 4
        %v2323 = vadd.f32 %v2321, %v2322
        %v2324 = vrot.slane %v2323, 2
        %v2325 = vadd.f32 %v2323, %v2324
        %v2326 = vrot.slane %v2325, 1
        %v2327 = vadd.f32 %v2325, %v2326
        %v2328 = vadd.f32 %v2179, %v2180
        %v2329 = vadd.f32 %v2328, %v2181
        %v2330 = vadd.f32 %v2329, %v2182
        %v2331 = vadd.f32 %v2330, %v2183
        %v2332 = vadd.f32 %v2331, %v2184
        %v2333 = vadd.f32 %v2332, %v2185
        %v2334 = vadd.f32 %v2333, %v2186
        %v2335 = vadd.f32 %v2334, %v2187
        %v2336 = vadd.f32 %v2335, %v2188
        %v2337 = vadd.f32 %v2336, %v2189
        %v2338 = vadd.f32 %v2337, %v2190
        %v2339 = vadd.f32 %v2338, %v2191
        %v2340 = vadd.f32 %v2339, %v2192
        %v2341 = vadd.f32 %v2340, %v2193
        %v2342 = vadd.f32 %v2341, %v2194
        %v2343 = vrot.slane %v2342, 4
        %v2344 = vadd.f32 %v2342, %v2343
        %v2345 = vrot.slane %v2344, 2
        %v2346 = vadd.f32 %v2344, %v2345
        %v2347 = vrot.slane %v2346, 1
        %v2348 = vadd.f32 %v2346, %v2347
        %v2349 = vadd.f32 %v2195, %v2196
        %v2350 = vadd.f32 %v2349, %v2197
        %v2351 = vadd.f32 %v2350, %v2198
        %v2352 = vadd.f32 %v2351, %v2199
        %v2353 = vadd.f32 %v2352, %v2200
        %v2354 = vadd.f32 %v2353, %v2201
        %v2355 = vadd.f32 %v2354, %v2202
        %v2356 = vadd.f32 %v2355, %v2203
        %v2357 = vadd.f32 %v2356, %v2204
        %v2358 = vadd.f32 %v2357, %v2205
        %v2359 = vadd.f32 %v2358, %v2206
        %v2360 = vadd.f32 %v2359, %v2207
        %v2361 = vadd.f32 %v2360, %v2208
        %v2362 = vadd.f32 %v2361, %v2209
        %v2363 = vadd.f32 %v2362, %v2210
        %v2364 = vrot.slane %v2363, 4
        %v2365 = vadd.f32 %v2363, %v2364
        %v2366 = vrot.slane %v2365, 2
        %v2367 = vadd.f32 %v2365, %v2366
        %v2368 = vrot.slane %v2367, 1
        %v2369 = vadd.f32 %v2367, %v2368
        %v2370 = vadd.f32 %v2211, %v2212
        %v2371 = vadd.f32 %v2370, %v2213
        %v2372 = vadd.f32 %v2371, %v2214
        %v2373 = vadd.f32 %v2372, %v2215
        %v2374 = vadd.f32 %v2373, %v2216
        %v2375 = vadd.f32 %v2374, %v2217
        %v2376 = vadd.f32 %v2375, %v2218
        %v2377 = vadd.f32 %v2376, %v2219
        %v2378 = vadd.f32 %v2377, %v2220
        %v2379 = vadd.f32 %v2378, %v2221
        %v2380 = vadd.f32 %v2379, %v2222
        %v2381 = vadd.f32 %v2380, %v2223
        %v2382 = vadd.f32 %v2381, %v2224
        %v2383 = vadd.f32 %v2382, %v2225
        %v2384 = vadd.f32 %v2383, %v2226
        %v2385 = vrot.slane %v2384, 4
        %v2386 = vadd.f32 %v2384, %v2385
        %v2387 = vrot.slane %v2386, 2
        %v2388 = vadd.f32 %v2386, %v2387
        %v2389 = vrot.slane %v2388, 1
        %v2390 = vadd.f32 %v2388, %v2389
        %v2391 = vadd.f32 %v2227, %v2228
        %v2392 = vadd.f32 %v2391, %v2229
        %v2393 = vadd.f32 %v2392, %v2230
        %v2394 = vadd.f32 %v2393, %v2231
        %v2395 = vadd.f32 %v2394, %v2232
        %v2396 = vadd.f32 %v2395, %v2233
        %v2397 = vadd.f32 %v2396, %v2234
        %v2398 = vadd.f32 %v2397, %v2235
        %v2399 = vadd.f32 %v2398, %v2236
        %v2400 = vadd.f32 %v2399, %v2237
        %v2401 = vadd.f32 %v2400, %v2238
        %v2402 = vadd.f32 %v2401, %v2239
        %v2403 = vadd.f32 %v2402, %v2240
        %v2404 = vadd.f32 %v2403, %v2241
        %v2405 = vadd.f32 %v2404, %v2242
        %v2406 = vrot.slane %v2405, 4
        %v2407 = vadd.f32 %v2405, %v2406
        %v2408 = vrot.slane %v2407, 2
        %v2409 = vadd.f32 %v2407, %v2408
        %v2410 = vrot.slane %v2409, 1
        %v2411 = vadd.f32 %v2409, %v2410
        %vm2420 = vcmask 1041409
        %v2421 = vsel %vm2420, %v2285, %v2264
        %vm2422 = vcmask 1042434
        %v2423 = vsel %vm2422, %v2306, %v2421
        %vm2424 = vcmask 1043459
        %v2425 = vsel %vm2424, %v2327, %v2423
        %vm2426 = vcmask 1044484
        %v2427 = vsel %vm2426, %v2348, %v2425
        %vm2428 = vcmask 1045509
        %v2429 = vsel %vm2428, %v2369, %v2427
        %vm2430 = vcmask 1046534
        %v2431 = vsel %vm2430, %v2390, %v2429
        %vm2432 = vcmask 1047559
        %v2433 = vsel %vm2432, %v2411, %v2431
        %v2435 = vadd.f32 %v2243, %v2433
        %2436 = vst [vmem:[#allocation2] sm:$0xff] %v2435
        %p2437 = scmp.eq.s32.totalorder %s28, 1
        // Predicated region
        $region102: #{tpu_custom_call.1} parent=92 // pred_check
          %p2438 = pneg %p2437
        $region103: #{tpu_custom_call.1} parent=92 // pred_check_branch
          %2440 = sbr.rel (%p2438) target = $region105
        $region104: #{tpu_custom_call.1} parent=92 // pred_region
          %v2441 = vld [vmem:[#allocation2] sm:$0xff]
          %v2442 = vpack.c.bf16 %v2441, %v2441
          %v2443 = vld [vmem:[%s3] sm:$0xf]
          %v2444 = vld [vmem:[%s3 + $0x4] sm:$0xf]
          %v2445 = vld [vmem:[%s3 + $0x8] sm:$0xf]
          %v2446 = vld [vmem:[%s3 + $0xc] sm:$0xf]
          %v2447 = vld [vmem:[%s3 + $0x10] sm:$0xf]
          %v2448 = vld [vmem:[%s3 + $0x14] sm:$0xf]
          %v2449 = vld [vmem:[%s3 + $0x18] sm:$0xf]
          %v2450 = vld [vmem:[%s3 + $0x1c] sm:$0xf]
          %v2451 = vld [vmem:[%s3 + $0x20] sm:$0xf]
          %v2452 = vld [vmem:[%s3 + $0x24] sm:$0xf]
          %v2453 = vld [vmem:[%s3 + $0x28] sm:$0xf]
          %v2454 = vld [vmem:[%s3 + $0x2c] sm:$0xf]
          %v2455 = vld [vmem:[%s3 + $0x30] sm:$0xf]
          %v2456 = vld [vmem:[%s3 + $0x34] sm:$0xf]
          %v2457 = vld [vmem:[%s3 + $0x38] sm:$0xf]
          %v2458 = vld [vmem:[%s3 + $0x3c] sm:$0xf]
          %v2459 = vld [vmem:[%s4] sm:$0x1]
          %v2461 = vlaneseq
          %v2462 = vshrl.u32 %v2461, 7
          %v2463 = vsub.s32 0, %v2462
          %v2464 = vrot.slane %v2459, %v2463
          %v2482 = vunpack.c.l.b16 %v2443
          %v2483 = vunpack.c.l.b16 %v2444
          %v2484 = vunpack.c.l.b16 %v2445
          %v2485 = vunpack.c.l.b16 %v2446
          %v2486 = vunpack.c.l.b16 %v2447
          %v2487 = vunpack.c.l.b16 %v2448
          %v2488 = vunpack.c.l.b16 %v2449
          %v2489 = vunpack.c.l.b16 %v2450
          %v2490 = vunpack.c.l.b16 %v2451
          %v2491 = vunpack.c.l.b16 %v2452
          %v2492 = vunpack.c.l.b16 %v2453
          %v2493 = vunpack.c.l.b16 %v2454
          %v2494 = vunpack.c.l.b16 %v2455
          %v2495 = vunpack.c.l.b16 %v2456
          %v2496 = vunpack.c.l.b16 %v2457
          %v2497 = vunpack.c.l.b16 %v2458
          %v2498 = vpack.c.b16 %v2483, %v2482
          %v2499 = vpack.c.b16 %v2485, %v2484
          %v2500 = vpack.c.b16 %v2487, %v2486
          %v2501 = vpack.c.b16 %v2489, %v2488
          %v2502 = vpack.c.b16 %v2491, %v2490
          %v2503 = vpack.c.b16 %v2493, %v2492
          %v2504 = vpack.c.b16 %v2495, %v2494
          %v2505 = vpack.c.b16 %v2497, %v2496
          %2514 = vmatprep.subr.bf16.mxu0 0
          %2515 = vmatpush1.bf16.msra.mxu0 %v2498
          %2516 = vmatprep.subr.bf16.mxu0 0
          %2517 = vmatpush1.bf16.msra.mxu0 %v2499
          %2518 = vmatprep.subr.bf16.mxu0 0
          %2519 = vmatpush1.bf16.msra.mxu0 %v2500
          %2520 = vmatprep.subr.bf16.mxu0 0
          %2521 = vmatpush1.bf16.msra.mxu0 %v2501
          %2522 = vmatprep.subr.bf16.mxu0 0
          %2523 = vmatpush1.bf16.msra.mxu0 %v2502
          %2524 = vmatprep.subr.bf16.mxu0 0
          %2525 = vmatpush1.bf16.msra.mxu0 %v2503
          %2526 = vmatprep.subr.bf16.mxu0 0
          %2527 = vmatpush1.bf16.msra.mxu0 %v2504
          %2528 = vmatprep.subr.bf16.mxu0 0
          %2529 = vmatpush1.bf16.msra.mxu0 %v2505
          %2530 = vmatprep.subr.bf16.mxu0 0
          %2531 = vmatpush1.bf16.msra.mxu0 0
          %2532 = vmatprep.subr.bf16.mxu0 0
          %2533 = vmatpush1.bf16.msra.mxu0 0
          %2534 = vmatprep.subr.bf16.mxu0 0
          %2535 = vmatpush1.bf16.msra.mxu0 0
          %2536 = vmatprep.subr.bf16.mxu0 0
          %2537 = vmatpush1.bf16.msra.mxu0 0
          %2538 = vmatprep.subr.bf16.mxu0 0
          %2539 = vmatpush1.bf16.msra.mxu0 0
          %2540 = vmatprep.subr.bf16.mxu0 0
          %2541 = vmatpush1.bf16.msra.mxu0 0
          %2542 = vmatprep.subr.bf16.mxu0 0
          %2543 = vmatpush1.bf16.msra.mxu0 0
          %2544 = vmatprep.subr.bf16.mxu0 0
          %2545 = vmatpush1.bf16.msra.mxu0 0
          %2546 = vmatprep.mubr.bf16.mxu0 0
          %2547 = vmatmul.mubr.bf16.gmra.mrb[0].mxu0 %v2442
          %v2548 = vpop.f32.mrb[0].mxu0
          %v2549 = vadd.f32 %v2464, %v2548
          %v2550 = vpop.f32.mrb[0].mxu0
          %v2551 = vpop.f32.mrb[0].mxu0
          %v2552 = vpop.f32.mrb[0].mxu0
          %2553 = vdwg.mxu0
          %v2554 = vmax.f32 %v2549, 0.0
          %v2555 = vpack.c.bf16 %v2554, %v2554
          %v2556 = vld [vmem:[%s5] sm:$0xf]
          %v2557 = vld [vmem:[%s5 + $0x4] sm:$0xf]
          %v2558 = vld [vmem:[%s5 + $0x8] sm:$0xf]
          %v2559 = vld [vmem:[%s5 + $0xc] sm:$0xf]
          %v2560 = vld [vmem:[%s5 + $0x10] sm:$0xf]
          %v2561 = vld [vmem:[%s5 + $0x14] sm:$0xf]
          %v2562 = vld [vmem:[%s5 + $0x18] sm:$0xf]
          %v2563 = vld [vmem:[%s5 + $0x1c] sm:$0xf]
          %v2564 = vld [vmem:[%s5 + $0x20] sm:$0xf]
          %v2565 = vld [vmem:[%s5 + $0x24] sm:$0xf]
          %v2566 = vld [vmem:[%s5 + $0x28] sm:$0xf]
          %v2567 = vld [vmem:[%s5 + $0x2c] sm:$0xf]
          %v2568 = vld [vmem:[%s5 + $0x30] sm:$0xf]
          %v2569 = vld [vmem:[%s5 + $0x34] sm:$0xf]
          %v2570 = vld [vmem:[%s5 + $0x38] sm:$0xf]
          %v2571 = vld [vmem:[%s5 + $0x3c] sm:$0xf]
          %v2572 = vld [vmem:[%s6] sm:$0x1]
          %v2574 = vlaneseq
          %v2575 = vshrl.u32 %v2574, 7
          %v2576 = vsub.s32 0, %v2575
          %v2577 = vrot.slane %v2572, %v2576
          %v2595 = vunpack.c.l.b16 %v2556
          %v2596 = vunpack.c.l.b16 %v2557
          %v2597 = vunpack.c.l.b16 %v2558
          %v2598 = vunpack.c.l.b16 %v2559
          %v2599 = vunpack.c.l.b16 %v2560
          %v2600 = vunpack.c.l.b16 %v2561
          %v2601 = vunpack.c.l.b16 %v2562
          %v2602 = vunpack.c.l.b16 %v2563
          %v2603 = vunpack.c.l.b16 %v2564
          %v2604 = vunpack.c.l.b16 %v2565
          %v2605 = vunpack.c.l.b16 %v2566
          %v2606 = vunpack.c.l.b16 %v2567
          %v2607 = vunpack.c.l.b16 %v2568
          %v2608 = vunpack.c.l.b16 %v2569
          %v2609 = vunpack.c.l.b16 %v2570
          %v2610 = vunpack.c.l.b16 %v2571
          %v2611 = vpack.c.b16 %v2596, %v2595
          %v2612 = vpack.c.b16 %v2598, %v2597
          %v2613 = vpack.c.b16 %v2600, %v2599
          %v2614 = vpack.c.b16 %v2602, %v2601
          %v2615 = vpack.c.b16 %v2604, %v2603
          %v2616 = vpack.c.b16 %v2606, %v2605
          %v2617 = vpack.c.b16 %v2608, %v2607
          %v2618 = vpack.c.b16 %v2610, %v2609
          %2627 = vmatprep.subr.bf16.mxu0 0
          %2628 = vmatpush1.bf16.msra.mxu0 %v2611
          %2629 = vmatprep.subr.bf16.mxu0 0
          %2630 = vmatpush1.bf16.msra.mxu0 %v2612
          %2631 = vmatprep.subr.bf16.mxu0 0
          %2632 = vmatpush1.bf16.msra.mxu0 %v2613
          %2633 = vmatprep.subr.bf16.mxu0 0
          %2634 = vmatpush1.bf16.msra.mxu0 %v2614
          %2635 = vmatprep.subr.bf16.mxu0 0
          %2636 = vmatpush1.bf16.msra.mxu0 %v2615
          %2637 = vmatprep.subr.bf16.mxu0 0
          %2638 = vmatpush1.bf16.msra.mxu0 %v2616
          %2639 = vmatprep.subr.bf16.mxu0 0
          %2640 = vmatpush1.bf16.msra.mxu0 %v2617
          %2641 = vmatprep.subr.bf16.mxu0 0
          %2642 = vmatpush1.bf16.msra.mxu0 %v2618
          %2643 = vmatprep.subr.bf16.mxu0 0
          %2644 = vmatpush1.bf16.msra.mxu0 0
          %2645 = vmatprep.subr.bf16.mxu0 0
          %2646 = vmatpush1.bf16.msra.mxu0 0
          %2647 = vmatprep.subr.bf16.mxu0 0
          %2648 = vmatpush1.bf16.msra.mxu0 0
          %2649 = vmatprep.subr.bf16.mxu0 0
          %2650 = vmatpush1.bf16.msra.mxu0 0
          %2651 = vmatprep.subr.bf16.mxu0 0
          %2652 = vmatpush1.bf16.msra.mxu0 0
          %2653 = vmatprep.subr.bf16.mxu0 0
          %2654 = vmatpush1.bf16.msra.mxu0 0
          %2655 = vmatprep.subr.bf16.mxu0 0
          %2656 = vmatpush1.bf16.msra.mxu0 0
          %2657 = vmatprep.subr.bf16.mxu0 0
          %2658 = vmatpush1.bf16.msra.mxu0 0
          %2659 = vmatprep.mubr.bf16.mxu0 0
          %2660 = vmatmul.mubr.bf16.gmra.mrb[0].mxu0 %v2555
          %v2661 = vpop.f32.mrb[0].mxu0
          %v2662 = vadd.f32 %v2577, %v2661
          %v2663 = vpop.f32.mrb[0].mxu0
          %v2664 = vpop.f32.mrb[0].mxu0
          %v2665 = vpop.f32.mrb[0].mxu0
          %2666 = vdwg.mxu0
          %v2667 = vmax.f32 %v2662, 0.0
          %v2668 = vpack.c.bf16 %v2667, %v2667
          %v2669 = vld [vmem:[%s7] sm:$0xf]
          %v2670 = vld [vmem:[%s7 + $0x4] sm:$0xf]
          %v2671 = vld [vmem:[%s7 + $0x8] sm:$0xf]
          %v2672 = vld [vmem:[%s7 + $0xc] sm:$0xf]
          %v2673 = vld [vmem:[%s7 + $0x10] sm:$0xf]
          %v2674 = vld [vmem:[%s7 + $0x14] sm:$0xf]
          %v2675 = vld [vmem:[%s7 + $0x18] sm:$0xf]
          %v2676 = vld [vmem:[%s7 + $0x1c] sm:$0xf]
          %v2677 = vld [vmem:[%s7 + $0x20] sm:$0xf]
          %v2678 = vld [vmem:[%s7 + $0x24] sm:$0xf]
          %v2679 = vld [vmem:[%s7 + $0x28] sm:$0xf]
          %v2680 = vld [vmem:[%s7 + $0x2c] sm:$0xf]
          %v2681 = vld [vmem:[%s7 + $0x30] sm:$0xf]
          %v2682 = vld [vmem:[%s7 + $0x34] sm:$0xf]
          %v2683 = vld [vmem:[%s7 + $0x38] sm:$0xf]
          %v2684 = vld [vmem:[%s7 + $0x3c] sm:$0xf]
          %v2685 = vld [vmem:[%s8] sm:$0x1]
          %v2687 = vlaneseq
          %v2688 = vshrl.u32 %v2687, 7
          %v2689 = vsub.s32 0, %v2688
          %v2690 = vrot.slane %v2685, %v2689
          %v2708 = vunpack.c.l.b16 %v2669
          %v2709 = vunpack.c.l.b16 %v2670
          %v2710 = vunpack.c.l.b16 %v2671
          %v2711 = vunpack.c.l.b16 %v2672
          %v2712 = vunpack.c.l.b16 %v2673
          %v2713 = vunpack.c.l.b16 %v2674
          %v2714 = vunpack.c.l.b16 %v2675
          %v2715 = vunpack.c.l.b16 %v2676
          %v2716 = vunpack.c.l.b16 %v2677
          %v2717 = vunpack.c.l.b16 %v2678
          %v2718 = vunpack.c.l.b16 %v2679
          %v2719 = vunpack.c.l.b16 %v2680
          %v2720 = vunpack.c.l.b16 %v2681
          %v2721 = vunpack.c.l.b16 %v2682
          %v2722 = vunpack.c.l.b16 %v2683
          %v2723 = vunpack.c.l.b16 %v2684
          %v2724 = vpack.c.b16 %v2709, %v2708
          %v2725 = vpack.c.b16 %v2711, %v2710
          %v2726 = vpack.c.b16 %v2713, %v2712
          %v2727 = vpack.c.b16 %v2715, %v2714
          %v2728 = vpack.c.b16 %v2717, %v2716
          %v2729 = vpack.c.b16 %v2719, %v2718
          %v2730 = vpack.c.b16 %v2721, %v2720
          %v2731 = vpack.c.b16 %v2723, %v2722
          %2740 = vmatprep.subr.bf16.mxu0 0
          %2741 = vmatpush1.bf16.msra.mxu0 %v2724
          %2742 = vmatprep.subr.bf16.mxu0 0
          %2743 = vmatpush1.bf16.msra.mxu0 %v2725
          %2744 = vmatprep.subr.bf16.mxu0 0
          %2745 = vmatpush1.bf16.msra.mxu0 %v2726
          %2746 = vmatprep.subr.bf16.mxu0 0
          %2747 = vmatpush1.bf16.msra.mxu0 %v2727
          %2748 = vmatprep.subr.bf16.mxu0 0
          %2749 = vmatpush1.bf16.msra.mxu0 %v2728
          %2750 = vmatprep.subr.bf16.mxu0 0
          %2751 = vmatpush1.bf16.msra.mxu0 %v2729
          %2752 = vmatprep.subr.bf16.mxu0 0
          %2753 = vmatpush1.bf16.msra.mxu0 %v2730
          %2754 = vmatprep.subr.bf16.mxu0 0
          %2755 = vmatpush1.bf16.msra.mxu0 %v2731
          %2756 = vmatprep.subr.bf16.mxu0 0
          %2757 = vmatpush1.bf16.msra.mxu0 0
          %2758 = vmatprep.subr.bf16.mxu0 0
          %2759 = vmatpush1.bf16.msra.mxu0 0
          %2760 = vmatprep.subr.bf16.mxu0 0
          %2761 = vmatpush1.bf16.msra.mxu0 0
          %2762 = vmatprep.subr.bf16.mxu0 0
          %2763 = vmatpush1.bf16.msra.mxu0 0
          %2764 = vmatprep.subr.bf16.mxu0 0
          %2765 = vmatpush1.bf16.msra.mxu0 0
          %2766 = vmatprep.subr.bf16.mxu0 0
          %2767 = vmatpush1.bf16.msra.mxu0 0
          %2768 = vmatprep.subr.bf16.mxu0 0
          %2769 = vmatpush1.bf16.msra.mxu0 0
          %2770 = vmatprep.subr.bf16.mxu0 0
          %2771 = vmatpush1.bf16.msra.mxu0 0
          %2772 = vmatprep.mubr.bf16.mxu0 0
          %2773 = vmatmul.mubr.bf16.gmra.mrb[0].mxu0 %v2668
          %v2774 = vpop.f32.mrb[0].mxu0
          %v2775 = vadd.f32 %v2690, %v2774
          %v2776 = vpop.f32.mrb[0].mxu0
          %v2777 = vpop.f32.mrb[0].mxu0
          %v2778 = vpop.f32.mrb[0].mxu0
          %2779 = vdwg.mxu0
          %2780 = vst [vmem:[%s897] sm:$0xff] %v2775
        $region105: #{tpu_custom_call.1} parent=92 // pred_fallthru
          _
        %s2781 = sand.u32 %s239, 1
        %s2782 = scalar_lea.sflag [#allocation5], %s2781
        %s2783 = sand.u32 %s239, 1
        %s2784 = smul.addr %s2783, 8
        %s2785 = scalar_lea.vmem [#allocation4], %s2784
        // Predicated region
        $region106: #{tpu_custom_call.1} parent=92 // pred_check
          %p2786 = pneg %p249
        $region107: #{tpu_custom_call.1} parent=92 // pred_check_branch
          %2788 = sbr.rel (%p2786) target = $region109
        $region108: #{tpu_custom_call.1} parent=92 // pred_region
          %s2790 = ssub.s32 128, 128
          %2791 = vsyncadd %s2782, %s2790
          %s2792 = smul.addr %s27, 128
          %s2793 = scalar_lea.hbm %s9, %s2792
          %s2795 = sshll.u32 %s2785, 4
          %s2796 = int_to_ptr.vmem [resolvable:$true] %s2795
          %2798 = dma.vmem_to_hbm [thread:$0]  %s2796, 128, %s2793, %s2782
        $region109: #{tpu_custom_call.1} parent=92 // pred_fallthru
          _
      $region93: #{tpu_custom_call.1} parent=5 // pred_fallthru
        _
      %p2799 = scmp.le.s32.totalorder 2, %s18
      // Predicated region
      $region110: #{tpu_custom_call.1} parent=5 // pred_check
        %p2800 = pneg %p2799
      $region111: #{tpu_custom_call.1} parent=5 // pred_check_branch
        %2802 = sbr.rel (%p2800) target = $region113
      $region112: #{tpu_custom_call.1} parent=5 // pred_region
        %s2803 = ssub.s32 %s18, 2
        // Predicated region
        $region114: #{tpu_custom_call.1} parent=112 // pred_check
          %p2804 = pneg %p255
        $region115: #{tpu_custom_call.1} parent=112 // pred_check_branch
          %2806 = sbr.rel (%p2804) target = $region117
        $region116: #{tpu_custom_call.1} parent=112 // pred_region
          %s2807 = sand.u32 %s240, 1
          %s2808 = scalar_lea.sflag [#allocation5], %s2807
          %s2809 = sand.u32 %s240, 1
          %s2810 = smul.addr %s2809, 8
          %s2811 = scalar_lea.vmem [#allocation4], %s2810
          %2812 = dma.done %s2808, 128
        $region117: #{tpu_custom_call.1} parent=112 // pred_fallthru
          _
      $region113: #{tpu_custom_call.1} parent=5 // pred_fallthru
        _
    $region6: #{tpu_custom_call.1} parent=1 // loop_footer
      %s22 = sadd.s32 1, %s18
    $region7: #{tpu_custom_call.1} parent=1 // loop_footer_branch
      %17 = sbr.rel target = $region3
    $region8: #{tpu_custom_call.1} parent=1 // loop_exit
      _
    %2813 = vsyncpa [#allocation5], 1
    %s2814 = scalar_lea.sflag [#allocation5], 1
    %2815 = vsyncpa %s2814, 1

</llo_original>
